<compile_context>
chip_gen: v5e
topology: v5e:2x2
jax: 0.10.0
libtpu: 0.0.40
codegen_flags: <defaults>
</compile_context>

<pallas_src>
import functools

import jax
import jax.numpy as jnp
from jax.experimental import pallas as pl
from jax.experimental.pallas import tpu as pltpu


# ----------------------------- Pallas kernels ------------------------------

def _matmul_bias_act_kernel(x_ref, w_ref, b_ref, o_ref, *, apply_relu):
    # bf16 x bf16 -> f32 accumulation on the MXU, fused bias (+ ReLU).
    acc = jnp.dot(x_ref[...], w_ref[...], preferred_element_type=jnp.float32)
    acc = acc + b_ref[...]                      # (1, N) broadcasts over (tm, N)
    if apply_relu:
        acc = jnp.maximum(acc, 0.0)
    o_ref[...] = acc.astype(o_ref.dtype)


def matmul_bias_act(x, w, b_row, *, apply_relu, out_dtype, tm_max=512):
    """y = x @ w + b (optionally ReLU). x:[M,K] bf16, w:[K,N] bf16, b:[1,N] f32."""
    M, K = x.shape
    K2, N = w.shape
    assert K == K2 and b_row.shape == (1, N)
    tm = M if M <= tm_max else tm_max
    kern = functools.partial(_matmul_bias_act_kernel, apply_relu=apply_relu)
    return pl.pallas_call(
        kern,
        out_shape=jax.ShapeDtypeStruct((M, N), out_dtype),
        grid=(pl.cdiv(M, tm),),
        in_specs=[
            pl.BlockSpec((tm, K), lambda i: (i, 0)),
            pl.BlockSpec((K, N), lambda i: (0, 0)),
            pl.BlockSpec((1, N), lambda i: (0, 0)),
        ],
        out_specs=pl.BlockSpec((tm, N), lambda i: (i, 0)),
        compiler_params=pltpu.CompilerParams(
            dimension_semantics=("parallel",)),
    )(x, w, b_row)


def _heads_dueling_kernel(z_ref, w1_ref, b1_ref, w2_ref, b2_ref, o_ref, *,
                          nb_actions, nb_atoms):
    # hidden = relu(z @ [v1 | a1] + b1)                 lane-dense N = 1024
    h = jnp.dot(z_ref[...], w1_ref[...], preferred_element_type=jnp.float32)
    h = jnp.maximum(h + b1_ref[...], 0.0).astype(w2_ref.dtype)
    # y = hidden @ blockdiag(v2, a2) + b2               lane-dense, N padded to 128x
    y = jnp.dot(h, w2_ref[...], preferred_element_type=jnp.float32)
    y = y + b2_ref[...]
    Z, A = nb_atoms, nb_actions
    v = y[:, :Z]                                        # (B, Z)
    adv = [y[:, Z * (1 + a):Z * (2 + a)] for a in range(A)]
    adv_mean = adv[0]
    for a in range(1, A):
        adv_mean = adv_mean + adv[a]
    adv_mean = adv_mean * (1.0 / A)
    for a in range(A):                                  # dueling epilogue
        o_ref[:, a, :] = (v + adv[a] - adv_mean).astype(o_ref.dtype)


def heads_dueling(z, w1, b1, w2, b2, *, nb_actions, nb_atoms, tb_max=256):
    B, K1 = z.shape
    K1b, N1 = w1.shape
    K2, N2 = w2.shape
    assert K1 == K1b and K2 == N1
    tb = B if B <= tb_max else tb_max
    kern = functools.partial(_heads_dueling_kernel,
                             nb_actions=nb_actions, nb_atoms=nb_atoms)
    return pl.pallas_call(
        kern,
        out_shape=jax.ShapeDtypeStruct((B, nb_actions, nb_atoms), jnp.float32),
        grid=(pl.cdiv(B, tb),),
        in_specs=[
            pl.BlockSpec((tb, K1), lambda i: (i, 0)),
            pl.BlockSpec((K1, N1), lambda i: (0, 0)),
            pl.BlockSpec((1, N1), lambda i: (0, 0)),
            pl.BlockSpec((K2, N2), lambda i: (0, 0)),
            pl.BlockSpec((1, N2), lambda i: (0, 0)),
        ],
        out_specs=pl.BlockSpec((tb, nb_actions, nb_atoms), lambda i: (i, 0, 0)),
        compiler_params=pltpu.CompilerParams(
            dimension_semantics=("parallel",)),
    )(z, w1, b1, w2, b2)


# ------------------------------- JAX glue -----------------------------------

def _im2col(x, kh, kw, stride):
    """x:[B,H,W,C] -> patches [B*OH*OW, kh*kw*C] (patch index order (kh,kw,c))."""
    B, H, W, C = x.shape
    oh = (H - kh) // stride + 1
    ow = (W - kw) // stride + 1
    cols = []
    for i in range(kh):
        for j in range(kw):
            cols.append(x[:, i:i + stride * oh:stride, j:j + stride * ow:stride, :])
    p = jnp.stack(cols, axis=3)                       # [B, oh, ow, kh*kw, C]
    return p.reshape(B * oh * ow, kh * kw * C), oh, ow


def conv2d_relu(x_nhwc, w_mat, b_row, *, k, stride):
    """Valid-padding Conv2d + ReLU with pre-transposed (kh*kw*c, oc) weights."""
    B = x_nhwc.shape[0]
    oc = w_mat.shape[1]
    patches, oh, ow = _im2col(x_nhwc, k, k, stride)
    y = matmul_bias_act(patches, w_mat, b_row, apply_relu=True,
                        out_dtype=jnp.bfloat16)
    return y.reshape(B, oh, ow, oc)


def _conv_out(n, k, s):
    return (n - k) // s + 1


def init_params(key, in_shape, nb_actions, nb_atoms):
    C, H, W = in_shape
    ks = jax.random.split(key, 24)

    def u(k, shape, fan_in):
        bound = 1.0 / jnp.sqrt(jnp.float32(fan_in))
        return jax.random.uniform(k, shape, jnp.float32, -bound, bound)

    h1, w1s = _conv_out(H, 8, 4), _conv_out(W, 8, 4)
    h2, w2s = _conv_out(h1, 4, 2), _conv_out(w1s, 4, 2)
    h3, w3s = _conv_out(h2, 3, 1), _conv_out(w2s, 3, 1)
    conv_size = 64 * h3 * w3s

    p = {}

    def conv_params(kw_, kb_, oc, ic, k):
        w_oihw = u(kw_, (oc, ic, k, k), ic * k * k)
        b = u(kb_, (oc,), ic * k * k)
        # Hoisted from the hot path: OIHW -> (kh*kw*ic, oc), (kh,kw,c) row order.
        w_mat = jnp.transpose(w_oihw, (2, 3, 1, 0)).reshape(k * k * ic, oc)
        return w_mat.astype(jnp.bfloat16), b.reshape(1, oc)

    p["c1_w"], p["c1_b"] = conv_params(ks[0], ks[1], 32, C, 8)
    p["c2_w"], p["c2_b"] = conv_params(ks[2], ks[3], 64, 32, 4)
    p["c3_w"], p["c3_b"] = conv_params(ks[4], ks[5], 64, 64, 3)

    # TODO(synk): PyTorch NoisyLinear resamples epsilon every forward; here the
    # noise is a fixed deterministic draw folded into effective weights at init.
    def noisy(kw_, kb_, kew, keb, in_f, out_f, sigma0=0.017):
        w_mu = u(kw_, (in_f, out_f), in_f)            # stored as [in, out]
        b_mu = u(kb_, (out_f,), in_f)
        eps_w = jax.random.normal(kew, (in_f, out_f), jnp.float32)
        eps_b = jax.random.normal(keb, (out_f,), jnp.float32)
        return w_mu + sigma0 * eps_w, b_mu + sigma0 * eps_b

    v1_w, v1_b = noisy(ks[6], ks[7], ks[8], ks[9], conv_size, 512)
    v2_w, v2_b = noisy(ks[10], ks[11], ks[12], ks[13], 512, nb_atoms)
    a1_w, a1_b = noisy(ks[14], ks[15], ks[16], ks[17], conv_size, 512)
    a2_w, a2_b = noisy(ks[18], ks[19], ks[20], ks[21], 512, nb_actions * nb_atoms)

    # Hoisted: permute first-head rows from NCHW-flatten to NHWC-flatten order
    # so the forward can skip the activation transpose before the heads.
    def to_nhwc_rows(w):
        return (w.reshape(64, h3, w3s, -1)
                 .transpose(1, 2, 0, 3)
                 .reshape(conv_size, -1))

    w1 = jnp.concatenate([to_nhwc_rows(v1_w), to_nhwc_rows(a1_w)], axis=1)
    b1 = jnp.concatenate([v1_b, a1_b]).reshape(1, 1024)

    # Second head: block-diagonal [v2 0; 0 a2], N padded to a 128 multiple.
    Z, A = nb_atoms, nb_actions
    n2 = Z + A * Z
    n2_pad = ((n2 + 127) // 128) * 128
    w2 = jnp.zeros((1024, n2_pad), jnp.float32)
    w2 = w2.at[:512, :Z].set(v2_w)
    w2 = w2.at[512:, Z:Z + A * Z].set(a2_w)
    b2 = jnp.zeros((n2_pad,), jnp.float32).at[:Z].set(v2_b).at[Z:Z + A * Z].set(a2_b)

    p["h1_w"] = w1.astype(jnp.bfloat16)
    p["h1_b"] = b1                       # f32
    p["h2_w"] = w2.astype(jnp.bfloat16)
    p["h2_b"] = b2.reshape(1, n2_pad)    # f32
    return p


def dqn_forward(x_nchw, params, *, nb_actions, nb_atoms):
    # layout: input NCHW (like PyTorch); convs computed on NHWC/im2col tiles.
    x = jnp.transpose(x_nchw, (0, 2, 3, 1)).astype(jnp.bfloat16)   # NCHW -> NHWC
    x = conv2d_relu(x, params["c1_w"], params["c1_b"], k=8, stride=4)
    x = conv2d_relu(x, params["c2_w"], params["c2_b"], k=4, stride=2)
    x = conv2d_relu(x, params["c3_w"], params["c3_b"], k=3, stride=1)
    B = x.shape[0]
    # NHWC flatten; head-1 weight rows were permuted at init to match exactly.
    z = x.reshape(B, -1)
    return heads_dueling(z, params["h1_w"], params["h1_b"],
                         params["h2_w"], params["h2_b"],
                         nb_actions=nb_actions, nb_atoms=nb_atoms)


# --------------------------------- main --------------------------------------

if __name__ == "__main__":
    # Small-but-valid config: conv stack (k8s4, k4s2, k3s1) on 44x44 inputs
    # gives spatial sizes 10 -> 4 -> 2, so conv_size = 64 * 2 * 2 = 256.
    in_shape = (4, 44, 44)        # (C, H, W) as in the PyTorch module
    nb_actions = 4
    nb_atoms = 51
    batch = 2

    key = jax.random.PRNGKey(0)
    k_x, k_p = jax.random.split(key)
    x = jax.random.normal(k_x, (batch,) + in_shape, jnp.float32)   # NCHW input
    params = init_params(k_p, in_shape, nb_actions, nb_atoms)

    fwd = jax.jit(functools.partial(dqn_forward,
                                    nb_actions=nb_actions, nb_atoms=nb_atoms))
    out = fwd(x, params)
    out = jax.block_until_ready(out)
    assert out.shape == (batch, nb_actions, nb_atoms)
    assert bool(jnp.all(jnp.isfinite(out)))
    print("KERNEL_OK")
</pallas_src>

<mosaic_0001>
module attributes {stable_mosaic.version = 11 : i64} {
  func.func @_matmul_bias_act_kernel(%arg0: i32, %arg1: memref<200x256xbf16, #tpu.memory_space<vmem>>, %arg2: memref<256x32xbf16, #tpu.memory_space<vmem>>, %arg3: memref<1x32xf32, #tpu.memory_space<vmem>>, %arg4: memref<200x32xbf16, #tpu.memory_space<vmem>>) attributes {dimension_semantics = [#tpu.dimension_semantics<parallel>], iteration_bounds = array<i64: 1>, scalar_prefetch = 0 : i64, scratch_operands = 0 : i64, tpu.core_type = #tpu.core_type<tc>, window_params = [{transform_indices = @transform_0, window_bounds = array<i64: 200, 256>}, {pipeline_mode = #tpu.pipeline_mode<synchronous>, transform_indices = @transform_1, window_bounds = array<i64: 256, 32>}, {pipeline_mode = #tpu.pipeline_mode<synchronous>, transform_indices = @transform_2, window_bounds = array<i64: 1, 32>}, {transform_indices = @transform_3, window_bounds = array<i64: 200, 32>}]} {
    %c0 = arith.constant 0 : index
    %c0_0 = arith.constant 0 : index
    %0 = vector.load %arg1[%c0, %c0_0] : memref<200x256xbf16, #tpu.memory_space<vmem>>, vector<200x256xbf16>
    %c0_1 = arith.constant 0 : index
    %c0_2 = arith.constant 0 : index
    %1 = vector.load %arg2[%c0_1, %c0_2] : memref<256x32xbf16, #tpu.memory_space<vmem>>, vector<256x32xbf16>
    %cst = arith.constant dense<0.000000e+00> : vector<200x32xf32>
    %2 = tpu.matmul %0, %1, %cst {dimension_numbers = #tpu.dot_dimension_numbers<[1], [0], [0], [1], [0, 0, 1, 1], [], []>} : vector<200x256xbf16>, vector<256x32xbf16>, vector<200x32xf32> -> vector<200x32xf32>
    %c0_3 = arith.constant 0 : index
    %c0_4 = arith.constant 0 : index
    %3 = vector.load %arg3[%c0_3, %c0_4] : memref<1x32xf32, #tpu.memory_space<vmem>>, vector<1x32xf32>
    %4 = vector.broadcast %3 : vector<1x32xf32> to vector<200x32xf32>
    %5 = arith.addf %2, %4 : vector<200x32xf32>
    %cst_5 = arith.constant 0.000000e+00 : f32
    %6 = vector.broadcast %cst_5 : f32 to vector<200x32xf32>
    %7 = arith.maximumf %5, %6 : vector<200x32xf32>
    %8 = arith.truncf %7 : vector<200x32xf32> to vector<200x32xbf16>
    %c0_6 = arith.constant 0 : index
    %c0_7 = arith.constant 0 : index
    %9 = vector.load %arg4[%c0_6, %c0_7] : memref<200x32xbf16, #tpu.memory_space<vmem>>, vector<200x32xbf16>
    tpu.vector_store %arg4[%c0_6, %c0_7], %8 {strides = array<i32>} : memref<200x32xbf16, #tpu.memory_space<vmem>>, vector<200x32xbf16>,
    return
  }
  func.func @transform_0(%arg0: i32) -> (i32, i32) {
    %c0_i32 = arith.constant 0 : i32
    %c0_i32_0 = arith.constant 0 : i32
    return %arg0, %c0_i32 : i32, i32
  }
  func.func @transform_1(%arg0: i32) -> (i32, i32) {
    %c0_i32 = arith.constant 0 : i32
    %c0_i32_0 = arith.constant 0 : i32
    %c0_i32_1 = arith.constant 0 : i32
    return %c0_i32, %c0_i32_0 : i32, i32
  }
  func.func @transform_2(%arg0: i32) -> (i32, i32) {
    %c0_i32 = arith.constant 0 : i32
    %c0_i32_0 = arith.constant 0 : i32
    %c0_i32_1 = arith.constant 0 : i32
    return %c0_i32, %c0_i32_0 : i32, i32
  }
  func.func @transform_3(%arg0: i32) -> (i32, i32) {
    %c0_i32 = arith.constant 0 : i32
    %c0_i32_0 = arith.constant 0 : i32
    return %arg0, %c0_i32 : i32, i32
  }
}

module attributes {stable_mosaic.version = 11 : i64} {
  func.func @_matmul_bias_act_kernel(%arg0: i32, %arg1: memref<32x512xbf16, #tpu.memory_space<vmem>>, %arg2: memref<512x64xbf16, #tpu.memory_space<vmem>>, %arg3: memref<1x64xf32, #tpu.memory_space<vmem>>, %arg4: memref<32x64xbf16, #tpu.memory_space<vmem>>) attributes {dimension_semantics = [#tpu.dimension_semantics<parallel>], iteration_bounds = array<i64: 1>, scalar_prefetch = 0 : i64, scratch_operands = 0 : i64, tpu.core_type = #tpu.core_type<tc>, window_params = [{transform_indices = @transform_0, window_bounds = array<i64: 32, 512>}, {pipeline_mode = #tpu.pipeline_mode<synchronous>, transform_indices = @transform_1, window_bounds = array<i64: 512, 64>}, {pipeline_mode = #tpu.pipeline_mode<synchronous>, transform_indices = @transform_2, window_bounds = array<i64: 1, 64>}, {transform_indices = @transform_3, window_bounds = array<i64: 32, 64>}]} {
    %c0 = arith.constant 0 : index
    %c0_0 = arith.constant 0 : index
    %0 = vector.load %arg1[%c0, %c0_0] : memref<32x512xbf16, #tpu.memory_space<vmem>>, vector<32x512xbf16>
    %c0_1 = arith.constant 0 : index
    %c0_2 = arith.constant 0 : index
    %1 = vector.load %arg2[%c0_1, %c0_2] : memref<512x64xbf16, #tpu.memory_space<vmem>>, vector<512x64xbf16>
    %cst = arith.constant dense<0.000000e+00> : vector<32x64xf32>
    %2 = tpu.matmul %0, %1, %cst {dimension_numbers = #tpu.dot_dimension_numbers<[1], [0], [0], [1], [0, 0, 1, 1], [], []>} : vector<32x512xbf16>, vector<512x64xbf16>, vector<32x64xf32> -> vector<32x64xf32>
    %c0_3 = arith.constant 0 : index
    %c0_4 = arith.constant 0 : index
    %3 = vector.load %arg3[%c0_3, %c0_4] : memref<1x64xf32, #tpu.memory_space<vmem>>, vector<1x64xf32>
    %4 = vector.broadcast %3 : vector<1x64xf32> to vector<32x64xf32>
    %5 = arith.addf %2, %4 : vector<32x64xf32>
    %cst_5 = arith.constant 0.000000e+00 : f32
    %6 = vector.broadcast %cst_5 : f32 to vector<32x64xf32>
    %7 = arith.maximumf %5, %6 : vector<32x64xf32>
    %8 = arith.truncf %7 : vector<32x64xf32> to vector<32x64xbf16>
    %c0_6 = arith.constant 0 : index
    %c0_7 = arith.constant 0 : index
    %9 = vector.load %arg4[%c0_6, %c0_7] : memref<32x64xbf16, #tpu.memory_space<vmem>>, vector<32x64xbf16>
    tpu.vector_store %arg4[%c0_6, %c0_7], %8 {strides = array<i32>} : memref<32x64xbf16, #tpu.memory_space<vmem>>, vector<32x64xbf16>,
    return
  }
  func.func @transform_0(%arg0: i32) -> (i32, i32) {
    %c0_i32 = arith.constant 0 : i32
    %c0_i32_0 = arith.constant 0 : i32
    return %arg0, %c0_i32 : i32, i32
  }
  func.func @transform_1(%arg0: i32) -> (i32, i32) {
    %c0_i32 = arith.constant 0 : i32
    %c0_i32_0 = arith.constant 0 : i32
    %c0_i32_1 = arith.constant 0 : i32
    return %c0_i32, %c0_i32_0 : i32, i32
  }
  func.func @transform_2(%arg0: i32) -> (i32, i32) {
    %c0_i32 = arith.constant 0 : i32
    %c0_i32_0 = arith.constant 0 : i32
    %c0_i32_1 = arith.constant 0 : i32
    return %c0_i32, %c0_i32_0 : i32, i32
  }
  func.func @transform_3(%arg0: i32) -> (i32, i32) {
    %c0_i32 = arith.constant 0 : i32
    %c0_i32_0 = arith.constant 0 : i32
    return %arg0, %c0_i32 : i32, i32
  }
}

module attributes {stable_mosaic.version = 11 : i64} {
  func.func @_matmul_bias_act_kernel(%arg0: i32, %arg1: memref<8x576xbf16, #tpu.memory_space<vmem>>, %arg2: memref<576x64xbf16, #tpu.memory_space<vmem>>, %arg3: memref<1x64xf32, #tpu.memory_space<vmem>>, %arg4: memref<8x64xbf16, #tpu.memory_space<vmem>>) attributes {dimension_semantics = [#tpu.dimension_semantics<parallel>], iteration_bounds = array<i64: 1>, scalar_prefetch = 0 : i64, scratch_operands = 0 : i64, tpu.core_type = #tpu.core_type<tc>, window_params = [{transform_indices = @transform_0, window_bounds = array<i64: 8, 576>}, {pipeline_mode = #tpu.pipeline_mode<synchronous>, transform_indices = @transform_1, window_bounds = array<i64: 576, 64>}, {pipeline_mode = #tpu.pipeline_mode<synchronous>, transform_indices = @transform_2, window_bounds = array<i64: 1, 64>}, {transform_indices = @transform_3, window_bounds = array<i64: 8, 64>}]} {
    %c0 = arith.constant 0 : index
    %c0_0 = arith.constant 0 : index
    %0 = vector.load %arg1[%c0, %c0_0] : memref<8x576xbf16, #tpu.memory_space<vmem>>, vector<8x576xbf16>
    %c0_1 = arith.constant 0 : index
    %c0_2 = arith.constant 0 : index
    %1 = vector.load %arg2[%c0_1, %c0_2] : memref<576x64xbf16, #tpu.memory_space<vmem>>, vector<576x64xbf16>
    %cst = arith.constant dense<0.000000e+00> : vector<8x64xf32>
    %2 = tpu.matmul %0, %1, %cst {dimension_numbers = #tpu.dot_dimension_numbers<[1], [0], [0], [1], [0, 0, 1, 1], [], []>} : vector<8x576xbf16>, vector<576x64xbf16>, vector<8x64xf32> -> vector<8x64xf32>
    %c0_3 = arith.constant 0 : index
    %c0_4 = arith.constant 0 : index
    %3 = vector.load %arg3[%c0_3, %c0_4] : memref<1x64xf32, #tpu.memory_space<vmem>>, vector<1x64xf32>
    %4 = vector.broadcast %3 : vector<1x64xf32> to vector<8x64xf32>
    %5 = arith.addf %2, %4 : vector<8x64xf32>
    %cst_5 = arith.constant 0.000000e+00 : f32
    %6 = vector.broadcast %cst_5 : f32 to vector<8x64xf32>
    %7 = arith.maximumf %5, %6 : vector<8x64xf32>
    %8 = arith.truncf %7 : vector<8x64xf32> to vector<8x64xbf16>
    %c0_6 = arith.constant 0 : index
    %c0_7 = arith.constant 0 : index
    %9 = vector.load %arg4[%c0_6, %c0_7] : memref<8x64xbf16, #tpu.memory_space<vmem>>, vector<8x64xbf16>
    tpu.vector_store %arg4[%c0_6, %c0_7], %8 {strides = array<i32>} : memref<8x64xbf16, #tpu.memory_space<vmem>>, vector<8x64xbf16>,
    return
  }
  func.func @transform_0(%arg0: i32) -> (i32, i32) {
    %c0_i32 = arith.constant 0 : i32
    %c0_i32_0 = arith.constant 0 : i32
    return %arg0, %c0_i32 : i32, i32
  }
  func.func @transform_1(%arg0: i32) -> (i32, i32) {
    %c0_i32 = arith.constant 0 : i32
    %c0_i32_0 = arith.constant 0 : i32
    %c0_i32_1 = arith.constant 0 : i32
    return %c0_i32, %c0_i32_0 : i32, i32
  }
  func.func @transform_2(%arg0: i32) -> (i32, i32) {
    %c0_i32 = arith.constant 0 : i32
    %c0_i32_0 = arith.constant 0 : i32
    %c0_i32_1 = arith.constant 0 : i32
    return %c0_i32, %c0_i32_0 : i32, i32
  }
  func.func @transform_3(%arg0: i32) -> (i32, i32) {
    %c0_i32 = arith.constant 0 : i32
    %c0_i32_0 = arith.constant 0 : i32
    return %arg0, %c0_i32 : i32, i32
  }
}

module attributes {stable_mosaic.version = 11 : i64} {
  func.func @_heads_dueling_kernel(%arg0: i32, %arg1: memref<2x256xbf16, #tpu.memory_space<vmem>>, %arg2: memref<256x1024xbf16, #tpu.memory_space<vmem>>, %arg3: memref<1x1024xf32, #tpu.memory_space<vmem>>, %arg4: memref<1024x256xbf16, #tpu.memory_space<vmem>>, %arg5: memref<1x256xf32, #tpu.memory_space<vmem>>, %arg6: memref<2x4x51xf32, #tpu.memory_space<vmem>>) attributes {dimension_semantics = [#tpu.dimension_semantics<parallel>], iteration_bounds = array<i64: 1>, scalar_prefetch = 0 : i64, scratch_operands = 0 : i64, tpu.core_type = #tpu.core_type<tc>, window_params = [{transform_indices = @transform_0, window_bounds = array<i64: 2, 256>}, {pipeline_mode = #tpu.pipeline_mode<synchronous>, transform_indices = @transform_1, window_bounds = array<i64: 256, 1024>}, {pipeline_mode = #tpu.pipeline_mode<synchronous>, transform_indices = @transform_2, window_bounds = array<i64: 1, 1024>}, {pipeline_mode = #tpu.pipeline_mode<synchronous>, transform_indices = @transform_3, window_bounds = array<i64: 1024, 256>}, {pipeline_mode = #tpu.pipeline_mode<synchronous>, transform_indices = @transform_4, window_bounds = array<i64: 1, 256>}, {transform_indices = @transform_5, window_bounds = array<i64: 2, 4, 51>}]} {
    %c0 = arith.constant 0 : index
    %c0_0 = arith.constant 0 : index
    %0 = vector.load %arg1[%c0, %c0_0] : memref<2x256xbf16, #tpu.memory_space<vmem>>, vector<2x256xbf16>
    %c0_1 = arith.constant 0 : index
    %c0_2 = arith.constant 0 : index
    %1 = vector.load %arg2[%c0_1, %c0_2] : memref<256x1024xbf16, #tpu.memory_space<vmem>>, vector<256x1024xbf16>
    %cst = arith.constant dense<0.000000e+00> : vector<2x1024xf32>
    %2 = tpu.matmul %0, %1, %cst {dimension_numbers = #tpu.dot_dimension_numbers<[1], [0], [0], [1], [0, 0, 1, 1], [], []>} : vector<2x256xbf16>, vector<256x1024xbf16>, vector<2x1024xf32> -> vector<2x1024xf32>
    %c0_3 = arith.constant 0 : index
    %c0_4 = arith.constant 0 : index
    %3 = vector.load %arg3[%c0_3, %c0_4] : memref<1x1024xf32, #tpu.memory_space<vmem>>, vector<1x1024xf32>
    %4 = vector.broadcast %3 : vector<1x1024xf32> to vector<2x1024xf32>
    %5 = arith.addf %2, %4 : vector<2x1024xf32>
    %cst_5 = arith.constant 0.000000e+00 : f32
    %6 = vector.broadcast %cst_5 : f32 to vector<2x1024xf32>
    %7 = arith.maximumf %5, %6 : vector<2x1024xf32>
    %8 = arith.truncf %7 : vector<2x1024xf32> to vector<2x1024xbf16>
    %c0_6 = arith.constant 0 : index
    %c0_7 = arith.constant 0 : index
    %9 = vector.load %arg4[%c0_6, %c0_7] : memref<1024x256xbf16, #tpu.memory_space<vmem>>, vector<1024x256xbf16>
    %cst_8 = arith.constant dense<0.000000e+00> : vector<2x256xf32>
    %10 = tpu.matmul %8, %9, %cst_8 {dimension_numbers = #tpu.dot_dimension_numbers<[1], [0], [0], [1], [0, 0, 1, 1], [], []>} : vector<2x1024xbf16>, vector<1024x256xbf16>, vector<2x256xf32> -> vector<2x256xf32>
    %c0_9 = arith.constant 0 : index
    %c0_10 = arith.constant 0 : index
    %11 = vector.load %arg5[%c0_9, %c0_10] : memref<1x256xf32, #tpu.memory_space<vmem>>, vector<1x256xf32>
    %12 = vector.broadcast %11 : vector<1x256xf32> to vector<2x256xf32>
    %13 = arith.addf %10, %12 : vector<2x256xf32>
    %14 = vector.extract_strided_slice %13 {offsets = [0, 0], sizes = [2, 51], strides = [1, 1]} : vector<2x256xf32> to vector<2x51xf32>
    %15 = vector.extract_strided_slice %13 {offsets = [0, 51], sizes = [2, 51], strides = [1, 1]} : vector<2x256xf32> to vector<2x51xf32>
    %16 = vector.extract_strided_slice %13 {offsets = [0, 102], sizes = [2, 51], strides = [1, 1]} : vector<2x256xf32> to vector<2x51xf32>
    %17 = vector.extract_strided_slice %13 {offsets = [0, 153], sizes = [2, 51], strides = [1, 1]} : vector<2x256xf32> to vector<2x51xf32>
    %18 = vector.extract_strided_slice %13 {offsets = [0, 204], sizes = [2, 51], strides = [1, 1]} : vector<2x256xf32> to vector<2x51xf32>
    %19 = arith.addf %15, %16 : vector<2x51xf32>
    %20 = arith.addf %19, %17 : vector<2x51xf32>
    %21 = arith.addf %20, %18 : vector<2x51xf32>
    %cst_11 = arith.constant 2.500000e-01 : f32
    %22 = vector.broadcast %cst_11 : f32 to vector<2x51xf32>
    %23 = arith.mulf %21, %22 : vector<2x51xf32>
    %24 = arith.addf %14, %15 : vector<2x51xf32>
    %25 = arith.subf %24, %23 : vector<2x51xf32>
    %c0_12 = arith.constant 0 : index
    %c0_13 = arith.constant 0 : index
    %c0_14 = arith.constant 0 : index
    %26 = vector.load %arg6[%c0_12, %c0_13, %c0_14] : memref<2x4x51xf32, #tpu.memory_space<vmem>>, vector<2x1x51xf32>
    %27 = vector.shape_cast %26 : vector<2x1x51xf32> to vector<2x51xf32>
    %28 = vector.shape_cast %25 : vector<2x51xf32> to vector<2x1x51xf32>
    tpu.vector_store %arg6[%c0_12, %c0_13, %c0_14], %28 {strides = array<i32>} : memref<2x4x51xf32, #tpu.memory_space<vmem>>, vector<2x1x51xf32>,
    %29 = arith.addf %14, %16 : vector<2x51xf32>
    %30 = arith.subf %29, %23 : vector<2x51xf32>
    %c0_15 = arith.constant 0 : index
    %c1 = arith.constant 1 : index
    %c0_16 = arith.constant 0 : index
    %31 = vector.load %arg6[%c0_15, %c1, %c0_16] : memref<2x4x51xf32, #tpu.memory_space<vmem>>, vector<2x1x51xf32>
    %32 = vector.shape_cast %31 : vector<2x1x51xf32> to vector<2x51xf32>
    %33 = vector.shape_cast %30 : vector<2x51xf32> to vector<2x1x51xf32>
    tpu.vector_store %arg6[%c0_15, %c1, %c0_16], %33 {strides = array<i32>} : memref<2x4x51xf32, #tpu.memory_space<vmem>>, vector<2x1x51xf32>,
    %34 = arith.addf %14, %17 : vector<2x51xf32>
    %35 = arith.subf %34, %23 : vector<2x51xf32>
    %c0_17 = arith.constant 0 : index
    %c2 = arith.constant 2 : index
    %c0_18 = arith.constant 0 : index
    %36 = vector.load %arg6[%c0_17, %c2, %c0_18] : memref<2x4x51xf32, #tpu.memory_space<vmem>>, vector<2x1x51xf32>
    %37 = vector.shape_cast %36 : vector<2x1x51xf32> to vector<2x51xf32>
    %38 = vector.shape_cast %35 : vector<2x51xf32> to vector<2x1x51xf32>
    tpu.vector_store %arg6[%c0_17, %c2, %c0_18], %38 {strides = array<i32>} : memref<2x4x51xf32, #tpu.memory_space<vmem>>, vector<2x1x51xf32>,
    %39 = arith.addf %14, %18 : vector<2x51xf32>
    %40 = arith.subf %39, %23 : vector<2x51xf32>
    %c0_19 = arith.constant 0 : index
    %c3 = arith.constant 3 : index
    %c0_20 = arith.constant 0 : index
    %41 = vector.load %arg6[%c0_19, %c3, %c0_20] : memref<2x4x51xf32, #tpu.memory_space<vmem>>, vector<2x1x51xf32>
    %42 = vector.shape_cast %41 : vector<2x1x51xf32> to vector<2x51xf32>
    %43 = vector.shape_cast %40 : vector<2x51xf32> to vector<2x1x51xf32>
    tpu.vector_store %arg6[%c0_19, %c3, %c0_20], %43 {strides = array<i32>} : memref<2x4x51xf32, #tpu.memory_space<vmem>>, vector<2x1x51xf32>,
    return
  }
  func.func @transform_0(%arg0: i32) -> (i32, i32) {
    %c0_i32 = arith.constant 0 : i32
    %c0_i32_0 = arith.constant 0 : i32
    return %arg0, %c0_i32 : i32, i32
  }
  func.func @transform_1(%arg0: i32) -> (i32, i32) {
    %c0_i32 = arith.constant 0 : i32
    %c0_i32_0 = arith.constant 0 : i32
    %c0_i32_1 = arith.constant 0 : i32
    return %c0_i32, %c0_i32_0 : i32, i32
  }
  func.func @transform_2(%arg0: i32) -> (i32, i32) {
    %c0_i32 = arith.constant 0 : i32
    %c0_i32_0 = arith.constant 0 : i32
    %c0_i32_1 = arith.constant 0 : i32
    return %c0_i32, %c0_i32_0 : i32, i32
  }
  func.func @transform_3(%arg0: i32) -> (i32, i32) {
    %c0_i32 = arith.constant 0 : i32
    %c0_i32_0 = arith.constant 0 : i32
    %c0_i32_1 = arith.constant 0 : i32
    return %c0_i32, %c0_i32_0 : i32, i32
  }
  func.func @transform_4(%arg0: i32) -> (i32, i32) {
    %c0_i32 = arith.constant 0 : i32
    %c0_i32_0 = arith.constant 0 : i32
    %c0_i32_1 = arith.constant 0 : i32
    return %c0_i32, %c0_i32_0 : i32, i32
  }
  func.func @transform_5(%arg0: i32) -> (i32, i32, i32) {
    %c0_i32 = arith.constant 0 : i32
    %c0_i32_0 = arith.constant 0 : i32
    %c0_i32_1 = arith.constant 0 : i32
    return %arg0, %c0_i32, %c0_i32_0 : i32, i32, i32
  }
}

</mosaic_0001>

<llo_original>
// kernel: dqn_forward.4
$region0: #{dqn_forward.4}
  #allocation0 [shape = 'u32[]', space=smem, size = 0x4, offset = 0x4, fixed_abs, tag = 'smem constant byte address 0x4 - core index']
  #allocation1 [shape = 'u32[72,128]{1,0:T(1,128)}', space=vmem, size = 0x9000, scoped, tag = 'internal scratch']
  %s0 = inlined_call_operand.vmem [shape: bf16[200,256], index: 0, kind: input, shape index: {}]
  %s1 = inlined_call_operand.vmem [shape: bf16[256,32], index: 1, kind: input, shape index: {}]
  %s2 = inlined_call_operand.vmem [shape: f32[1,32], index: 2, kind: input, shape index: {}]
  %s3 = inlined_call_operand.vmem [shape: bf16[200,32], index: 3, kind: output, shape index: {}]
  %s4 = sld [smem:[#allocation0]]
  $region22: #{dqn_forward.4} parent=0
    _
  %s6 = ssub.s32 1, %s4
  %s7 = scalar_select 0, %s6, %s4
  // Predicated region
  $region2: #{dqn_forward.4} parent=0 // pred_check
    _
  $region3: #{dqn_forward.4} parent=0 // pred_check_branch
    %9 = sbr.rel (0) target = $region5
  $region4: #{dqn_forward.4} parent=0 // pred_region
    _
  $region5: #{dqn_forward.4} parent=0 // pred_fallthru
    _
  // Predicated region
  $region6: #{dqn_forward.4} parent=0 // pred_check
    _
  $region7: #{dqn_forward.4} parent=0 // pred_check_branch
    %11 = sbr.rel (0) target = $region9
  $region8: #{dqn_forward.4} parent=0 // pred_region
    _
  $region9: #{dqn_forward.4} parent=0 // pred_fallthru
    _
  // Predicated region
  $region10: #{dqn_forward.4} parent=0 // pred_check
    _
  $region11: #{dqn_forward.4} parent=0 // pred_check_branch
    %13 = sbr.rel (0) target = $region13
  $region12: #{dqn_forward.4} parent=0 // pred_region
    _
  $region13: #{dqn_forward.4} parent=0 // pred_fallthru
    _
  %v14 = vld [vmem:[%s0] sm:$0xff]
  %v15 = vld [vmem:[%s0 + $0x8] sm:$0xff]
  %v16 = vld [vmem:[%s0 + $0x10] sm:$0xff]
  %v17 = vld [vmem:[%s0 + $0x18] sm:$0xff]
  %v18 = vld [vmem:[%s0 + $0x20] sm:$0xff]
  %v19 = vld [vmem:[%s0 + $0x28] sm:$0xff]
  %v20 = vld [vmem:[%s0 + $0x30] sm:$0xff]
  %v21 = vld [vmem:[%s0 + $0x38] sm:$0xff]
  %v22 = vld [vmem:[%s0 + $0x40] sm:$0xff]
  %v23 = vld [vmem:[%s0 + $0x48] sm:$0xff]
  %v24 = vld [vmem:[%s0 + $0x50] sm:$0xff]
  %v25 = vld [vmem:[%s0 + $0x58] sm:$0xff]
  %v26 = vld [vmem:[%s0 + $0x60] sm:$0xff]
  %v27 = vld [vmem:[%s0 + $0x68] sm:$0xff]
  %v28 = vld [vmem:[%s0 + $0x70] sm:$0xff]
  %v29 = vld [vmem:[%s0 + $0x78] sm:$0xff]
  %v30 = vld [vmem:[%s0 + $0x80] sm:$0xff]
  %v31 = vld [vmem:[%s0 + $0x88] sm:$0xff]
  %v32 = vld [vmem:[%s0 + $0x90] sm:$0xff]
  %v33 = vld [vmem:[%s0 + $0x98] sm:$0xff]
  %v34 = vld [vmem:[%s0 + $0xa0] sm:$0xff]
  %v35 = vld [vmem:[%s0 + $0xa8] sm:$0xff]
  %v36 = vld [vmem:[%s0 + $0xb0] sm:$0xff]
  %v37 = vld [vmem:[%s0 + $0xb8] sm:$0xff]
  %v38 = vld [vmem:[%s0 + $0xc0] sm:$0xff]
  %v39 = vld [vmem:[%s1] sm:$0xf]
  %v40 = vld [vmem:[%s1 + $0x4] sm:$0xf]
  %v41 = vld [vmem:[%s1 + $0x8] sm:$0xf]
  %v42 = vld [vmem:[%s1 + $0xc] sm:$0xf]
  %v43 = vld [vmem:[%s1 + $0x10] sm:$0xf]
  %v44 = vld [vmem:[%s1 + $0x14] sm:$0xf]
  %v45 = vld [vmem:[%s1 + $0x18] sm:$0xf]
  %v46 = vld [vmem:[%s1 + $0x1c] sm:$0xf]
  %v47 = vld [vmem:[%s1 + $0x20] sm:$0xf]
  %v48 = vld [vmem:[%s1 + $0x24] sm:$0xf]
  %v49 = vld [vmem:[%s1 + $0x28] sm:$0xf]
  %v50 = vld [vmem:[%s1 + $0x2c] sm:$0xf]
  %v51 = vld [vmem:[%s1 + $0x30] sm:$0xf]
  %v52 = vld [vmem:[%s1 + $0x34] sm:$0xf]
  %v53 = vld [vmem:[%s1 + $0x38] sm:$0xf]
  %v54 = vld [vmem:[%s1 + $0x3c] sm:$0xf]
  %v55 = vld [vmem:[%s1 + $0x40] sm:$0xf]
  %v56 = vld [vmem:[%s1 + $0x44] sm:$0xf]
  %v57 = vld [vmem:[%s1 + $0x48] sm:$0xf]
  %v58 = vld [vmem:[%s1 + $0x4c] sm:$0xf]
  %v59 = vld [vmem:[%s1 + $0x50] sm:$0xf]
  %v60 = vld [vmem:[%s1 + $0x54] sm:$0xf]
  %v61 = vld [vmem:[%s1 + $0x58] sm:$0xf]
  %v62 = vld [vmem:[%s1 + $0x5c] sm:$0xf]
  %v63 = vld [vmem:[%s1 + $0x60] sm:$0xf]
  %v64 = vld [vmem:[%s1 + $0x64] sm:$0xf]
  %v65 = vld [vmem:[%s1 + $0x68] sm:$0xf]
  %v66 = vld [vmem:[%s1 + $0x6c] sm:$0xf]
  %v67 = vld [vmem:[%s1 + $0x70] sm:$0xf]
  %v68 = vld [vmem:[%s1 + $0x74] sm:$0xf]
  %v69 = vld [vmem:[%s1 + $0x78] sm:$0xf]
  %v70 = vld [vmem:[%s1 + $0x7c] sm:$0xf]
  %v71 = vld [vmem:[%s2] sm:$0x1]
  %v73 = vperm.slane %v71, 0
  %v100 = vunpack.c.l.b16 %v14
  %v101 = vunpack.c.h.b16 %v14
  %v102 = vunpack.c.l.b16 %v15
  %v103 = vunpack.c.h.b16 %v15
  %v104 = vunpack.c.l.b16 %v16
  %v105 = vunpack.c.h.b16 %v16
  %v106 = vunpack.c.l.b16 %v17
  %v107 = vunpack.c.h.b16 %v17
  %v108 = vunpack.c.l.b16 %v18
  %v109 = vunpack.c.h.b16 %v18
  %v110 = vunpack.c.l.b16 %v19
  %v111 = vunpack.c.h.b16 %v19
  %v112 = vunpack.c.l.b16 %v20
  %v113 = vunpack.c.h.b16 %v20
  %v114 = vunpack.c.l.b16 %v21
  %v115 = vunpack.c.h.b16 %v21
  %v116 = vunpack.c.l.b16 %v22
  %v117 = vunpack.c.h.b16 %v22
  %v118 = vunpack.c.l.b16 %v23
  %v119 = vunpack.c.h.b16 %v23
  %v120 = vunpack.c.l.b16 %v24
  %v121 = vunpack.c.h.b16 %v24
  %v122 = vunpack.c.l.b16 %v25
  %v123 = vunpack.c.h.b16 %v25
  %v124 = vunpack.c.l.b16 %v26
  %v125 = vunpack.c.h.b16 %v26
  %v126 = vunpack.c.l.b16 %v27
  %v127 = vunpack.c.h.b16 %v27
  %v128 = vunpack.c.l.b16 %v28
  %v129 = vunpack.c.h.b16 %v28
  %v130 = vunpack.c.l.b16 %v29
  %v131 = vunpack.c.h.b16 %v29
  %v132 = vunpack.c.l.b16 %v30
  %v133 = vunpack.c.h.b16 %v30
  %v134 = vunpack.c.l.b16 %v31
  %v135 = vunpack.c.h.b16 %v31
  %v136 = vunpack.c.l.b16 %v32
  %v137 = vunpack.c.h.b16 %v32
  %v138 = vunpack.c.l.b16 %v33
  %v139 = vunpack.c.h.b16 %v33
  %v140 = vunpack.c.l.b16 %v34
  %v141 = vunpack.c.h.b16 %v34
  %v142 = vunpack.c.l.b16 %v35
  %v143 = vunpack.c.h.b16 %v35
  %v144 = vunpack.c.l.b16 %v36
  %v145 = vunpack.c.h.b16 %v36
  %v146 = vunpack.c.l.b16 %v37
  %v147 = vunpack.c.h.b16 %v37
  %v148 = vunpack.c.l.b16 %v38
  %v149 = vunpack.c.h.b16 %v38
  %v150 = vpack.c.b16 %v102, %v100
  %v151 = vpack.c.b16 %v103, %v101
  %v152 = vpack.c.b16 %v106, %v104
  %v153 = vpack.c.b16 %v107, %v105
  %v154 = vpack.c.b16 %v110, %v108
  %v155 = vpack.c.b16 %v111, %v109
  %v156 = vpack.c.b16 %v114, %v112
  %v157 = vpack.c.b16 %v115, %v113
  %v158 = vpack.c.b16 %v118, %v116
  %v159 = vpack.c.b16 %v119, %v117
  %v160 = vpack.c.b16 %v122, %v120
  %v161 = vpack.c.b16 %v123, %v121
  %v162 = vpack.c.b16 %v126, %v124
  %v163 = vpack.c.b16 %v127, %v125
  %v164 = vpack.c.b16 %v130, %v128
  %v165 = vpack.c.b16 %v131, %v129
  %v166 = vpack.c.b16 %v134, %v132
  %v167 = vpack.c.b16 %v135, %v133
  %v168 = vpack.c.b16 %v138, %v136
  %v169 = vpack.c.b16 %v139, %v137
  %v170 = vpack.c.b16 %v142, %v140
  %v171 = vpack.c.b16 %v143, %v141
  %v172 = vpack.c.b16 %v146, %v144
  %v173 = vpack.c.b16 %v147, %v145
  %v174 = vpack.c.b16 %v148, %v148
  %v175 = vpack.c.b16 %v149, %v149
  %v234 = vunpack.c.l.b16 %v39
  %v235 = vunpack.c.l.b16 %v40
  %v236 = vunpack.c.l.b16 %v41
  %v237 = vunpack.c.l.b16 %v42
  %v238 = vunpack.c.l.b16 %v43
  %v239 = vunpack.c.l.b16 %v44
  %v240 = vunpack.c.l.b16 %v45
  %v241 = vunpack.c.l.b16 %v46
  %v242 = vunpack.c.l.b16 %v47
  %v243 = vunpack.c.l.b16 %v48
  %v244 = vunpack.c.l.b16 %v49
  %v245 = vunpack.c.l.b16 %v50
  %v246 = vunpack.c.l.b16 %v51
  %v247 = vunpack.c.l.b16 %v52
  %v248 = vunpack.c.l.b16 %v53
  %v249 = vunpack.c.l.b16 %v54
  %v250 = vunpack.c.l.b16 %v55
  %v251 = vunpack.c.l.b16 %v56
  %v252 = vunpack.c.l.b16 %v57
  %v253 = vunpack.c.l.b16 %v58
  %v254 = vunpack.c.l.b16 %v59
  %v255 = vunpack.c.l.b16 %v60
  %v256 = vunpack.c.l.b16 %v61
  %v257 = vunpack.c.l.b16 %v62
  %v258 = vunpack.c.l.b16 %v63
  %v259 = vunpack.c.l.b16 %v64
  %v260 = vunpack.c.l.b16 %v65
  %v261 = vunpack.c.l.b16 %v66
  %v262 = vunpack.c.l.b16 %v67
  %v263 = vunpack.c.l.b16 %v68
  %v264 = vunpack.c.l.b16 %v69
  %v265 = vunpack.c.l.b16 %v70
  %v266 = vpack.c.b16 %v235, %v234
  %v267 = vpack.c.b16 %v237, %v236
  %v268 = vpack.c.b16 %v239, %v238
  %v269 = vpack.c.b16 %v241, %v240
  %v270 = vpack.c.b16 %v243, %v242
  %v271 = vpack.c.b16 %v245, %v244
  %v272 = vpack.c.b16 %v247, %v246
  %v273 = vpack.c.b16 %v249, %v248
  %v274 = vpack.c.b16 %v251, %v250
  %v275 = vpack.c.b16 %v253, %v252
  %v276 = vpack.c.b16 %v255, %v254
  %v277 = vpack.c.b16 %v257, %v256
  %v278 = vpack.c.b16 %v259, %v258
  %v279 = vpack.c.b16 %v261, %v260
  %v280 = vpack.c.b16 %v263, %v262
  %v281 = vpack.c.b16 %v265, %v264
  %298 = vmatpush.bf16.msra.mxu0 %v273
  %299 = vmatpush.bf16.msra.mxu0 %v272
  %300 = vmatpush.bf16.msra.mxu0 %v271
  %301 = vmatpush.bf16.msra.mxu0 %v270
  %302 = vmatpush.bf16.msra.mxu0 %v269
  %303 = vmatpush.bf16.msra.mxu0 %v268
  %304 = vmatpush.bf16.msra.mxu0 %v267
  %305 = vmatpush.bf16.msra.mxu0 %v266
  %306 = vmatmul.bf16.gmra.mxu0 %v150
  %v307 = vpop.f32.mrf.mxu0
  %v308 = vadd.f32 %v73, %v307
  %v309 = vpop.f32.mrf.mxu0
  %v310 = vadd.f32 %v73, %v309
  %311 = vmatmul.bf16.gmra.mxu0 %v152
  %v312 = vpop.f32.mrf.mxu0
  %v313 = vadd.f32 %v73, %v312
  %v314 = vpop.f32.mrf.mxu0
  %v315 = vadd.f32 %v73, %v314
  %316 = vmatmul.bf16.gmra.mxu0 %v154
  %v317 = vpop.f32.mrf.mxu0
  %v318 = vadd.f32 %v73, %v317
  %v319 = vpop.f32.mrf.mxu0
  %v320 = vadd.f32 %v73, %v319
  %321 = vmatmul.bf16.gmra.mxu0 %v156
  %v322 = vpop.f32.mrf.mxu0
  %v323 = vadd.f32 %v73, %v322
  %v324 = vpop.f32.mrf.mxu0
  %v325 = vadd.f32 %v73, %v324
  %326 = vmatmul.bf16.gmra.mxu0 %v158
  %v327 = vpop.f32.mrf.mxu0
  %v328 = vadd.f32 %v73, %v327
  %v329 = vpop.f32.mrf.mxu0
  %v330 = vadd.f32 %v73, %v329
  %331 = vmatmul.bf16.gmra.mxu0 %v160
  %v332 = vpop.f32.mrf.mxu0
  %v333 = vadd.f32 %v73, %v332
  %v334 = vpop.f32.mrf.mxu0
  %v335 = vadd.f32 %v73, %v334
  %336 = vmatmul.bf16.gmra.mxu0 %v162
  %v337 = vpop.f32.mrf.mxu0
  %v338 = vadd.f32 %v73, %v337
  %v339 = vpop.f32.mrf.mxu0
  %v340 = vadd.f32 %v73, %v339
  %341 = vmatmul.bf16.gmra.mxu0 %v164
  %v342 = vpop.f32.mrf.mxu0
  %v343 = vadd.f32 %v73, %v342
  %v344 = vpop.f32.mrf.mxu0
  %v345 = vadd.f32 %v73, %v344
  %346 = vmatmul.bf16.gmra.mxu0 %v166
  %v347 = vpop.f32.mrf.mxu0
  %v348 = vadd.f32 %v73, %v347
  %v349 = vpop.f32.mrf.mxu0
  %v350 = vadd.f32 %v73, %v349
  %351 = vmatmul.bf16.gmra.mxu0 %v168
  %v352 = vpop.f32.mrf.mxu0
  %v353 = vadd.f32 %v73, %v352
  %v354 = vpop.f32.mrf.mxu0
  %v355 = vadd.f32 %v73, %v354
  %356 = vmatmul.bf16.gmra.mxu0 %v170
  %v357 = vpop.f32.mrf.mxu0
  %v358 = vadd.f32 %v73, %v357
  %v359 = vpop.f32.mrf.mxu0
  %v360 = vadd.f32 %v73, %v359
  %361 = vmatmul.bf16.gmra.mxu0 %v172
  %v362 = vpop.f32.mrf.mxu0
  %v363 = vadd.f32 %v73, %v362
  %v364 = vpop.f32.mrf.mxu0
  %v365 = vadd.f32 %v73, %v364
  %366 = vmatmul.bf16.gmra.mxu0 %v174
  %v367 = vpop.f32.mrf.mxu0
  %v368 = vadd.f32 %v73, %v367
  %v369 = vpop.f32.mrf.mxu0
  %370 = vdwg.mxu0
  %371 = vmatpush.bf16.msra.mxu0 %v281
  %372 = vmatpush.bf16.msra.mxu0 %v280
  %373 = vmatpush.bf16.msra.mxu0 %v279
  %374 = vmatpush.bf16.msra.mxu0 %v278
  %375 = vmatpush.bf16.msra.mxu0 %v277
  %376 = vmatpush.bf16.msra.mxu0 %v276
  %377 = vmatpush.bf16.msra.mxu0 %v275
  %378 = vmatpush.bf16.msra.mxu0 %v274
  %379 = vmatmul.bf16.gmra.mxu0 %v151
  %v380 = vpop.f32.mrf.mxu0
  %v381 = vadd.f32 %v308, %v380
  %v382 = vpop.f32.mrf.mxu0
  %v383 = vadd.f32 %v310, %v382
  %384 = vmatmul.bf16.gmra.mxu0 %v153
  %v385 = vpop.f32.mrf.mxu0
  %v386 = vadd.f32 %v313, %v385
  %v387 = vpop.f32.mrf.mxu0
  %v388 = vadd.f32 %v315, %v387
  %389 = vmatmul.bf16.gmra.mxu0 %v155
  %v390 = vpop.f32.mrf.mxu0
  %v391 = vadd.f32 %v318, %v390
  %v392 = vpop.f32.mrf.mxu0
  %v393 = vadd.f32 %v320, %v392
  %394 = vmatmul.bf16.gmra.mxu0 %v157
  %v395 = vpop.f32.mrf.mxu0
  %v396 = vadd.f32 %v323, %v395
  %v397 = vpop.f32.mrf.mxu0
  %v398 = vadd.f32 %v325, %v397
  %399 = vmatmul.bf16.gmra.mxu0 %v159
  %v400 = vpop.f32.mrf.mxu0
  %v401 = vadd.f32 %v328, %v400
  %v402 = vpop.f32.mrf.mxu0
  %v403 = vadd.f32 %v330, %v402
  %404 = vmatmul.bf16.gmra.mxu0 %v161
  %v405 = vpop.f32.mrf.mxu0
  %v406 = vadd.f32 %v333, %v405
  %v407 = vpop.f32.mrf.mxu0
  %v408 = vadd.f32 %v335, %v407
  %409 = vmatmul.bf16.gmra.mxu0 %v163
  %v410 = vpop.f32.mrf.mxu0
  %v411 = vadd.f32 %v338, %v410
  %v412 = vpop.f32.mrf.mxu0
  %v413 = vadd.f32 %v340, %v412
  %414 = vmatmul.bf16.gmra.mxu0 %v165
  %v415 = vpop.f32.mrf.mxu0
  %v416 = vadd.f32 %v343, %v415
  %v417 = vpop.f32.mrf.mxu0
  %v418 = vadd.f32 %v345, %v417
  %419 = vmatmul.bf16.gmra.mxu0 %v167
  %v420 = vpop.f32.mrf.mxu0
  %v421 = vadd.f32 %v348, %v420
  %v422 = vpop.f32.mrf.mxu0
  %v423 = vadd.f32 %v350, %v422
  %424 = vmatmul.bf16.gmra.mxu0 %v169
  %v425 = vpop.f32.mrf.mxu0
  %v426 = vadd.f32 %v353, %v425
  %v427 = vpop.f32.mrf.mxu0
  %v428 = vadd.f32 %v355, %v427
  %429 = vmatmul.bf16.gmra.mxu0 %v171
  %v430 = vpop.f32.mrf.mxu0
  %v431 = vadd.f32 %v358, %v430
  %v432 = vpop.f32.mrf.mxu0
  %v433 = vadd.f32 %v360, %v432
  %434 = vmatmul.bf16.gmra.mxu0 %v173
  %v435 = vpop.f32.mrf.mxu0
  %v436 = vadd.f32 %v363, %v435
  %v437 = vpop.f32.mrf.mxu0
  %v438 = vadd.f32 %v365, %v437
  %439 = vmatmul.bf16.gmra.mxu0 %v175
  %v440 = vpop.f32.mrf.mxu0
  %v441 = vadd.f32 %v368, %v440
  %v442 = vpop.f32.mrf.mxu0
  %443 = vdwg.mxu0
  %v444 = vmax.f32 %v381, 0.0
  %v445 = vmax.f32 %v383, 0.0
  %v446 = vmax.f32 %v386, 0.0
  %v447 = vmax.f32 %v388, 0.0
  %v448 = vmax.f32 %v391, 0.0
  %v449 = vmax.f32 %v393, 0.0
  %v450 = vmax.f32 %v396, 0.0
  %v451 = vmax.f32 %v398, 0.0
  %v452 = vmax.f32 %v401, 0.0
  %v453 = vmax.f32 %v403, 0.0
  %v454 = vmax.f32 %v406, 0.0
  %v455 = vmax.f32 %v408, 0.0
  %v456 = vmax.f32 %v411, 0.0
  %v457 = vmax.f32 %v413, 0.0
  %v458 = vmax.f32 %v416, 0.0
  %v459 = vmax.f32 %v418, 0.0
  %v460 = vmax.f32 %v421, 0.0
  %v461 = vmax.f32 %v423, 0.0
  %v462 = vmax.f32 %v426, 0.0
  %v463 = vmax.f32 %v428, 0.0
  %v464 = vmax.f32 %v431, 0.0
  %v465 = vmax.f32 %v433, 0.0
  %v466 = vmax.f32 %v436, 0.0
  %v467 = vmax.f32 %v438, 0.0
  %v468 = vmax.f32 %v441, 0.0
  %v469 = vpack.c.bf16 %v444, %v444
  %v470 = vpack.c.bf16 %v445, %v445
  %v471 = vpack.c.bf16 %v446, %v446
  %v472 = vpack.c.bf16 %v447, %v447
  %v473 = vpack.c.bf16 %v448, %v448
  %v474 = vpack.c.bf16 %v449, %v449
  %v475 = vpack.c.bf16 %v450, %v450
  %v476 = vpack.c.bf16 %v451, %v451
  %v477 = vpack.c.bf16 %v452, %v452
  %v478 = vpack.c.bf16 %v453, %v453
  %v479 = vpack.c.bf16 %v454, %v454
  %v480 = vpack.c.bf16 %v455, %v455
  %v481 = vpack.c.bf16 %v456, %v456
  %v482 = vpack.c.bf16 %v457, %v457
  %v483 = vpack.c.bf16 %v458, %v458
  %v484 = vpack.c.bf16 %v459, %v459
  %v485 = vpack.c.bf16 %v460, %v460
  %v486 = vpack.c.bf16 %v461, %v461
  %v487 = vpack.c.bf16 %v462, %v462
  %v488 = vpack.c.bf16 %v463, %v463
  %v489 = vpack.c.bf16 %v464, %v464
  %v490 = vpack.c.bf16 %v465, %v465
  %v491 = vpack.c.bf16 %v466, %v466
  %v492 = vpack.c.bf16 %v467, %v467
  %v493 = vpack.c.bf16 %v468, %v468
  %vm494 = vcmask 257024
  %495 = vst.msk [vmem:[%s3] sm:$0xf] %vm494, %v469
  %496 = vst.msk [vmem:[%s3 + $0x4] sm:$0xf] %vm494, %v470
  %497 = vst.msk [vmem:[%s3 + $0x8] sm:$0xf] %vm494, %v471
  %498 = vst.msk [vmem:[%s3 + $0xc] sm:$0xf] %vm494, %v472
  %499 = vst.msk [vmem:[%s3 + $0x10] sm:$0xf] %vm494, %v473
  %500 = vst.msk [vmem:[%s3 + $0x14] sm:$0xf] %vm494, %v474
  %501 = vst.msk [vmem:[%s3 + $0x18] sm:$0xf] %vm494, %v475
  %502 = vst.msk [vmem:[%s3 + $0x1c] sm:$0xf] %vm494, %v476
  %503 = vst.msk [vmem:[%s3 + $0x20] sm:$0xf] %vm494, %v477
  %504 = vst.msk [vmem:[%s3 + $0x24] sm:$0xf] %vm494, %v478
  %505 = vst.msk [vmem:[%s3 + $0x28] sm:$0xf] %vm494, %v479
  %506 = vst.msk [vmem:[%s3 + $0x2c] sm:$0xf] %vm494, %v480
  %507 = vst.msk [vmem:[%s3 + $0x30] sm:$0xf] %vm494, %v481
  %508 = vst.msk [vmem:[%s3 + $0x34] sm:$0xf] %vm494, %v482
  %509 = vst.msk [vmem:[%s3 + $0x38] sm:$0xf] %vm494, %v483
  %510 = vst.msk [vmem:[%s3 + $0x3c] sm:$0xf] %vm494, %v484
  %511 = vst.msk [vmem:[%s3 + $0x40] sm:$0xf] %vm494, %v485
  %512 = vst.msk [vmem:[%s3 + $0x44] sm:$0xf] %vm494, %v486
  %513 = vst.msk [vmem:[%s3 + $0x48] sm:$0xf] %vm494, %v487
  %514 = vst.msk [vmem:[%s3 + $0x4c] sm:$0xf] %vm494, %v488
  %515 = vst.msk [vmem:[%s3 + $0x50] sm:$0xf] %vm494, %v489
  %516 = vst.msk [vmem:[%s3 + $0x54] sm:$0xf] %vm494, %v490
  %517 = vst.msk [vmem:[%s3 + $0x58] sm:$0xf] %vm494, %v491
  %518 = vst.msk [vmem:[%s3 + $0x5c] sm:$0xf] %vm494, %v492
  %519 = vst.msk [vmem:[%s3 + $0x60] sm:$0xf] %vm494, %v493
  // Predicated region
  $region14: #{dqn_forward.4} parent=0 // pred_check
    _
  $region15: #{dqn_forward.4} parent=0 // pred_check_branch
    %521 = sbr.rel (0) target = $region17
  $region16: #{dqn_forward.4} parent=0 // pred_region
    _
  $region17: #{dqn_forward.4} parent=0 // pred_fallthru
    _
  // Predicated region
  $region18: #{dqn_forward.4} parent=0 // pred_check
    _
  $region19: #{dqn_forward.4} parent=0 // pred_check_branch
    %523 = sbr.rel (0) target = $region21
  $region20: #{dqn_forward.4} parent=0 // pred_region
    _
  $region21: #{dqn_forward.4} parent=0 // pred_fallthru
    _

// kernel: dqn_forward.5
$region0: #{dqn_forward.5}
  #allocation0 [shape = 'u32[]', space=smem, size = 0x4, offset = 0x4, fixed_abs, tag = 'smem constant byte address 0x4 - core index']
  #allocation1 [shape = 'u32[72,128]{1,0:T(1,128)}', space=vmem, size = 0x9000, scoped, tag = 'internal scratch']
  %s0 = inlined_call_operand.vmem [shape: bf16[32,512], index: 0, kind: input, shape index: {}]
  %s1 = inlined_call_operand.vmem [shape: bf16[512,64], index: 1, kind: input, shape index: {}]
  %s2 = inlined_call_operand.vmem [shape: f32[1,64], index: 2, kind: input, shape index: {}]
  %s3 = inlined_call_operand.vmem [shape: bf16[32,64], index: 3, kind: output, shape index: {}]
  %s4 = sld [smem:[#allocation0]]
  $region22: #{dqn_forward.5} parent=0
    _
  %s6 = ssub.s32 1, %s4
  %s7 = scalar_select 0, %s6, %s4
  // Predicated region
  $region2: #{dqn_forward.5} parent=0 // pred_check
    _
  $region3: #{dqn_forward.5} parent=0 // pred_check_branch
    %9 = sbr.rel (0) target = $region5
  $region4: #{dqn_forward.5} parent=0 // pred_region
    _
  $region5: #{dqn_forward.5} parent=0 // pred_fallthru
    _
  // Predicated region
  $region6: #{dqn_forward.5} parent=0 // pred_check
    _
  $region7: #{dqn_forward.5} parent=0 // pred_check_branch
    %11 = sbr.rel (0) target = $region9
  $region8: #{dqn_forward.5} parent=0 // pred_region
    _
  $region9: #{dqn_forward.5} parent=0 // pred_fallthru
    _
  // Predicated region
  $region10: #{dqn_forward.5} parent=0 // pred_check
    _
  $region11: #{dqn_forward.5} parent=0 // pred_check_branch
    %13 = sbr.rel (0) target = $region13
  $region12: #{dqn_forward.5} parent=0 // pred_region
    _
  $region13: #{dqn_forward.5} parent=0 // pred_fallthru
    _
  %v14 = vld [vmem:[%s0] sm:$0xff]
  %v15 = vld [vmem:[%s0 + $0x8] sm:$0xff]
  %v16 = vld [vmem:[%s0 + $0x10] sm:$0xff]
  %v17 = vld [vmem:[%s0 + $0x18] sm:$0xff]
  %v18 = vld [vmem:[%s0 + $0x20] sm:$0xff]
  %v19 = vld [vmem:[%s0 + $0x28] sm:$0xff]
  %v20 = vld [vmem:[%s0 + $0x30] sm:$0xff]
  %v21 = vld [vmem:[%s0 + $0x38] sm:$0xff]
  %v22 = vld [vmem:[%s1] sm:$0xf]
  %v23 = vld [vmem:[%s1 + $0x4] sm:$0xf]
  %v24 = vld [vmem:[%s1 + $0x8] sm:$0xf]
  %v25 = vld [vmem:[%s1 + $0xc] sm:$0xf]
  %v26 = vld [vmem:[%s1 + $0x10] sm:$0xf]
  %v27 = vld [vmem:[%s1 + $0x14] sm:$0xf]
  %v28 = vld [vmem:[%s1 + $0x18] sm:$0xf]
  %v29 = vld [vmem:[%s1 + $0x1c] sm:$0xf]
  %v30 = vld [vmem:[%s1 + $0x20] sm:$0xf]
  %v31 = vld [vmem:[%s1 + $0x24] sm:$0xf]
  %v32 = vld [vmem:[%s1 + $0x28] sm:$0xf]
  %v33 = vld [vmem:[%s1 + $0x2c] sm:$0xf]
  %v34 = vld [vmem:[%s1 + $0x30] sm:$0xf]
  %v35 = vld [vmem:[%s1 + $0x34] sm:$0xf]
  %v36 = vld [vmem:[%s1 + $0x38] sm:$0xf]
  %v37 = vld [vmem:[%s1 + $0x3c] sm:$0xf]
  %v38 = vld [vmem:[%s1 + $0x40] sm:$0xf]
  %v39 = vld [vmem:[%s1 + $0x44] sm:$0xf]
  %v40 = vld [vmem:[%s1 + $0x48] sm:$0xf]
  %v41 = vld [vmem:[%s1 + $0x4c] sm:$0xf]
  %v42 = vld [vmem:[%s1 + $0x50] sm:$0xf]
  %v43 = vld [vmem:[%s1 + $0x54] sm:$0xf]
  %v44 = vld [vmem:[%s1 + $0x58] sm:$0xf]
  %v45 = vld [vmem:[%s1 + $0x5c] sm:$0xf]
  %v46 = vld [vmem:[%s1 + $0x60] sm:$0xf]
  %v47 = vld [vmem:[%s1 + $0x64] sm:$0xf]
  %v48 = vld [vmem:[%s1 + $0x68] sm:$0xf]
  %v49 = vld [vmem:[%s1 + $0x6c] sm:$0xf]
  %v50 = vld [vmem:[%s1 + $0x70] sm:$0xf]
  %v51 = vld [vmem:[%s1 + $0x74] sm:$0xf]
  %v52 = vld [vmem:[%s1 + $0x78] sm:$0xf]
  %v53 = vld [vmem:[%s1 + $0x7c] sm:$0xf]
  %v54 = vld [vmem:[%s1 + $0x80] sm:$0xf]
  %v55 = vld [vmem:[%s1 + $0x84] sm:$0xf]
  %v56 = vld [vmem:[%s1 + $0x88] sm:$0xf]
  %v57 = vld [vmem:[%s1 + $0x8c] sm:$0xf]
  %v58 = vld [vmem:[%s1 + $0x90] sm:$0xf]
  %v59 = vld [vmem:[%s1 + $0x94] sm:$0xf]
  %v60 = vld [vmem:[%s1 + $0x98] sm:$0xf]
  %v61 = vld [vmem:[%s1 + $0x9c] sm:$0xf]
  %v62 = vld [vmem:[%s1 + $0xa0] sm:$0xf]
  %v63 = vld [vmem:[%s1 + $0xa4] sm:$0xf]
  %v64 = vld [vmem:[%s1 + $0xa8] sm:$0xf]
  %v65 = vld [vmem:[%s1 + $0xac] sm:$0xf]
  %v66 = vld [vmem:[%s1 + $0xb0] sm:$0xf]
  %v67 = vld [vmem:[%s1 + $0xb4] sm:$0xf]
  %v68 = vld [vmem:[%s1 + $0xb8] sm:$0xf]
  %v69 = vld [vmem:[%s1 + $0xbc] sm:$0xf]
  %v70 = vld [vmem:[%s1 + $0xc0] sm:$0xf]
  %v71 = vld [vmem:[%s1 + $0xc4] sm:$0xf]
  %v72 = vld [vmem:[%s1 + $0xc8] sm:$0xf]
  %v73 = vld [vmem:[%s1 + $0xcc] sm:$0xf]
  %v74 = vld [vmem:[%s1 + $0xd0] sm:$0xf]
  %v75 = vld [vmem:[%s1 + $0xd4] sm:$0xf]
  %v76 = vld [vmem:[%s1 + $0xd8] sm:$0xf]
  %v77 = vld [vmem:[%s1 + $0xdc] sm:$0xf]
  %v78 = vld [vmem:[%s1 + $0xe0] sm:$0xf]
  %v79 = vld [vmem:[%s1 + $0xe4] sm:$0xf]
  %v80 = vld [vmem:[%s1 + $0xe8] sm:$0xf]
  %v81 = vld [vmem:[%s1 + $0xec] sm:$0xf]
  %v82 = vld [vmem:[%s1 + $0xf0] sm:$0xf]
  %v83 = vld [vmem:[%s1 + $0xf4] sm:$0xf]
  %v84 = vld [vmem:[%s1 + $0xf8] sm:$0xf]
  %v85 = vld [vmem:[%s1 + $0xfc] sm:$0xf]
  %v86 = vld [vmem:[%s2] sm:$0x1]
  %v88 = vperm.slane %v86, 0
  %v98 = vunpack.c.l.b16 %v14
  %v99 = vunpack.c.h.b16 %v14
  %v100 = vunpack.c.l.b16 %v15
  %v101 = vunpack.c.h.b16 %v15
  %v102 = vunpack.c.l.b16 %v16
  %v103 = vunpack.c.h.b16 %v16
  %v104 = vunpack.c.l.b16 %v17
  %v105 = vunpack.c.h.b16 %v17
  %v106 = vunpack.c.l.b16 %v18
  %v107 = vunpack.c.h.b16 %v18
  %v108 = vunpack.c.l.b16 %v19
  %v109 = vunpack.c.h.b16 %v19
  %v110 = vunpack.c.l.b16 %v20
  %v111 = vunpack.c.h.b16 %v20
  %v112 = vunpack.c.l.b16 %v21
  %v113 = vunpack.c.h.b16 %v21
  %v114 = vpack.c.b16 %v102, %v98
  %v115 = vpack.c.b16 %v103, %v99
  %v116 = vpack.c.b16 %v104, %v100
  %v117 = vpack.c.b16 %v105, %v101
  %v118 = vpack.c.b16 %v110, %v106
  %v119 = vpack.c.b16 %v111, %v107
  %v120 = vpack.c.b16 %v112, %v108
  %v121 = vpack.c.b16 %v113, %v109
  %v194 = vunpack.c.l.b16 %v22
  %v195 = vunpack.c.l.b16 %v23
  %v196 = vunpack.c.l.b16 %v24
  %v197 = vunpack.c.l.b16 %v25
  %v198 = vunpack.c.l.b16 %v26
  %v199 = vunpack.c.l.b16 %v27
  %v200 = vunpack.c.l.b16 %v28
  %v201 = vunpack.c.l.b16 %v29
  %v202 = vunpack.c.l.b16 %v30
  %v203 = vunpack.c.l.b16 %v31
  %v204 = vunpack.c.l.b16 %v32
  %v205 = vunpack.c.l.b16 %v33
  %v206 = vunpack.c.l.b16 %v34
  %v207 = vunpack.c.l.b16 %v35
  %v208 = vunpack.c.l.b16 %v36
  %v209 = vunpack.c.l.b16 %v37
  %v210 = vunpack.c.l.b16 %v38
  %v211 = vunpack.c.l.b16 %v39
  %v212 = vunpack.c.l.b16 %v40
  %v213 = vunpack.c.l.b16 %v41
  %v214 = vunpack.c.l.b16 %v42
  %v215 = vunpack.c.l.b16 %v43
  %v216 = vunpack.c.l.b16 %v44
  %v217 = vunpack.c.l.b16 %v45
  %v218 = vunpack.c.l.b16 %v46
  %v219 = vunpack.c.l.b16 %v47
  %v220 = vunpack.c.l.b16 %v48
  %v221 = vunpack.c.l.b16 %v49
  %v222 = vunpack.c.l.b16 %v50
  %v223 = vunpack.c.l.b16 %v51
  %v224 = vunpack.c.l.b16 %v52
  %v225 = vunpack.c.l.b16 %v53
  %v226 = vunpack.c.l.b16 %v54
  %v227 = vunpack.c.l.b16 %v55
  %v228 = vunpack.c.l.b16 %v56
  %v229 = vunpack.c.l.b16 %v57
  %v230 = vunpack.c.l.b16 %v58
  %v231 = vunpack.c.l.b16 %v59
  %v232 = vunpack.c.l.b16 %v60
  %v233 = vunpack.c.l.b16 %v61
  %v234 = vunpack.c.l.b16 %v62
  %v235 = vunpack.c.l.b16 %v63
  %v236 = vunpack.c.l.b16 %v64
  %v237 = vunpack.c.l.b16 %v65
  %v238 = vunpack.c.l.b16 %v66
  %v239 = vunpack.c.l.b16 %v67
  %v240 = vunpack.c.l.b16 %v68
  %v241 = vunpack.c.l.b16 %v69
  %v242 = vunpack.c.l.b16 %v70
  %v243 = vunpack.c.l.b16 %v71
  %v244 = vunpack.c.l.b16 %v72
  %v245 = vunpack.c.l.b16 %v73
  %v246 = vunpack.c.l.b16 %v74
  %v247 = vunpack.c.l.b16 %v75
  %v248 = vunpack.c.l.b16 %v76
  %v249 = vunpack.c.l.b16 %v77
  %v250 = vunpack.c.l.b16 %v78
  %v251 = vunpack.c.l.b16 %v79
  %v252 = vunpack.c.l.b16 %v80
  %v253 = vunpack.c.l.b16 %v81
  %v254 = vunpack.c.l.b16 %v82
  %v255 = vunpack.c.l.b16 %v83
  %v256 = vunpack.c.l.b16 %v84
  %v257 = vunpack.c.l.b16 %v85
  %v258 = vpack.c.b16 %v195, %v194
  %v259 = vpack.c.b16 %v197, %v196
  %v260 = vpack.c.b16 %v199, %v198
  %v261 = vpack.c.b16 %v201, %v200
  %v262 = vpack.c.b16 %v203, %v202
  %v263 = vpack.c.b16 %v205, %v204
  %v264 = vpack.c.b16 %v207, %v206
  %v265 = vpack.c.b16 %v209, %v208
  %v266 = vpack.c.b16 %v211, %v210
  %v267 = vpack.c.b16 %v213, %v212
  %v268 = vpack.c.b16 %v215, %v214
  %v269 = vpack.c.b16 %v217, %v216
  %v270 = vpack.c.b16 %v219, %v218
  %v271 = vpack.c.b16 %v221, %v220
  %v272 = vpack.c.b16 %v223, %v222
  %v273 = vpack.c.b16 %v225, %v224
  %v274 = vpack.c.b16 %v227, %v226
  %v275 = vpack.c.b16 %v229, %v228
  %v276 = vpack.c.b16 %v231, %v230
  %v277 = vpack.c.b16 %v233, %v232
  %v278 = vpack.c.b16 %v235, %v234
  %v279 = vpack.c.b16 %v237, %v236
  %v280 = vpack.c.b16 %v239, %v238
  %v281 = vpack.c.b16 %v241, %v240
  %v282 = vpack.c.b16 %v243, %v242
  %v283 = vpack.c.b16 %v245, %v244
  %v284 = vpack.c.b16 %v247, %v246
  %v285 = vpack.c.b16 %v249, %v248
  %v286 = vpack.c.b16 %v251, %v250
  %v287 = vpack.c.b16 %v253, %v252
  %v288 = vpack.c.b16 %v255, %v254
  %v289 = vpack.c.b16 %v257, %v256
  %322 = vmatpush.bf16.msra.mxu0 %v265
  %323 = vmatpush.bf16.msra.mxu0 %v264
  %324 = vmatpush.bf16.msra.mxu0 %v263
  %325 = vmatpush.bf16.msra.mxu0 %v262
  %326 = vmatpush.bf16.msra.mxu0 %v261
  %327 = vmatpush.bf16.msra.mxu0 %v260
  %328 = vmatpush.bf16.msra.mxu0 %v259
  %329 = vmatpush.bf16.msra.mxu0 %v258
  %330 = vmatmul.bf16.gmra.mxu0 %v114
  %v331 = vpop.f32.mrf.mxu0
  %v332 = vadd.f32 %v88, %v331
  %v333 = vpop.f32.mrf.mxu0
  %v334 = vadd.f32 %v88, %v333
  %335 = vmatmul.bf16.gmra.mxu0 %v118
  %v336 = vpop.f32.mrf.mxu0
  %v337 = vadd.f32 %v88, %v336
  %v338 = vpop.f32.mrf.mxu0
  %v339 = vadd.f32 %v88, %v338
  %340 = vdwg.mxu0
  %341 = vmatpush.bf16.msra.mxu0 %v273
  %342 = vmatpush.bf16.msra.mxu0 %v272
  %343 = vmatpush.bf16.msra.mxu0 %v271
  %344 = vmatpush.bf16.msra.mxu0 %v270
  %345 = vmatpush.bf16.msra.mxu0 %v269
  %346 = vmatpush.bf16.msra.mxu0 %v268
  %347 = vmatpush.bf16.msra.mxu0 %v267
  %348 = vmatpush.bf16.msra.mxu0 %v266
  %349 = vmatmul.bf16.gmra.mxu0 %v115
  %v350 = vpop.f32.mrf.mxu0
  %v351 = vadd.f32 %v332, %v350
  %v352 = vpop.f32.mrf.mxu0
  %v353 = vadd.f32 %v334, %v352
  %354 = vmatmul.bf16.gmra.mxu0 %v119
  %v355 = vpop.f32.mrf.mxu0
  %v356 = vadd.f32 %v337, %v355
  %v357 = vpop.f32.mrf.mxu0
  %v358 = vadd.f32 %v339, %v357
  %359 = vdwg.mxu0
  %360 = vmatpush.bf16.msra.mxu0 %v281
  %361 = vmatpush.bf16.msra.mxu0 %v280
  %362 = vmatpush.bf16.msra.mxu0 %v279
  %363 = vmatpush.bf16.msra.mxu0 %v278
  %364 = vmatpush.bf16.msra.mxu0 %v277
  %365 = vmatpush.bf16.msra.mxu0 %v276
  %366 = vmatpush.bf16.msra.mxu0 %v275
  %367 = vmatpush.bf16.msra.mxu0 %v274
  %368 = vmatmul.bf16.gmra.mxu0 %v116
  %v369 = vpop.f32.mrf.mxu0
  %v370 = vadd.f32 %v351, %v369
  %v371 = vpop.f32.mrf.mxu0
  %v372 = vadd.f32 %v353, %v371
  %373 = vmatmul.bf16.gmra.mxu0 %v120
  %v374 = vpop.f32.mrf.mxu0
  %v375 = vadd.f32 %v356, %v374
  %v376 = vpop.f32.mrf.mxu0
  %v377 = vadd.f32 %v358, %v376
  %378 = vdwg.mxu0
  %379 = vmatpush.bf16.msra.mxu0 %v289
  %380 = vmatpush.bf16.msra.mxu0 %v288
  %381 = vmatpush.bf16.msra.mxu0 %v287
  %382 = vmatpush.bf16.msra.mxu0 %v286
  %383 = vmatpush.bf16.msra.mxu0 %v285
  %384 = vmatpush.bf16.msra.mxu0 %v284
  %385 = vmatpush.bf16.msra.mxu0 %v283
  %386 = vmatpush.bf16.msra.mxu0 %v282
  %387 = vmatmul.bf16.gmra.mxu0 %v117
  %v388 = vpop.f32.mrf.mxu0
  %v389 = vadd.f32 %v370, %v388
  %v390 = vpop.f32.mrf.mxu0
  %v391 = vadd.f32 %v372, %v390
  %392 = vmatmul.bf16.gmra.mxu0 %v121
  %v393 = vpop.f32.mrf.mxu0
  %v394 = vadd.f32 %v375, %v393
  %v395 = vpop.f32.mrf.mxu0
  %v396 = vadd.f32 %v377, %v395
  %397 = vdwg.mxu0
  %v398 = vmax.f32 %v389, 0.0
  %v399 = vmax.f32 %v391, 0.0
  %v400 = vmax.f32 %v394, 0.0
  %v401 = vmax.f32 %v396, 0.0
  %v402 = vpack.c.bf16 %v398, %v398
  %v403 = vpack.c.bf16 %v399, %v399
  %v404 = vpack.c.bf16 %v400, %v400
  %v405 = vpack.c.bf16 %v401, %v401
  %vm406 = vcmask 519168
  %407 = vst.msk [vmem:[%s3] sm:$0xf] %vm406, %v402
  %408 = vst.msk [vmem:[%s3 + $0x4] sm:$0xf] %vm406, %v403
  %409 = vst.msk [vmem:[%s3 + $0x8] sm:$0xf] %vm406, %v404
  %410 = vst.msk [vmem:[%s3 + $0xc] sm:$0xf] %vm406, %v405
  // Predicated region
  $region14: #{dqn_forward.5} parent=0 // pred_check
    _
  $region15: #{dqn_forward.5} parent=0 // pred_check_branch
    %412 = sbr.rel (0) target = $region17
  $region16: #{dqn_forward.5} parent=0 // pred_region
    _
  $region17: #{dqn_forward.5} parent=0 // pred_fallthru
    _
  // Predicated region
  $region18: #{dqn_forward.5} parent=0 // pred_check
    _
  $region19: #{dqn_forward.5} parent=0 // pred_check_branch
    %414 = sbr.rel (0) target = $region21
  $region20: #{dqn_forward.5} parent=0 // pred_region
    _
  $region21: #{dqn_forward.5} parent=0 // pred_fallthru
    _

// kernel: dqn_forward.6
$region0: #{dqn_forward.6}
  #allocation0 [shape = 'u32[]', space=smem, size = 0x4, offset = 0x4, fixed_abs, tag = 'smem constant byte address 0x4 - core index']
  #allocation1 [shape = 'u32[72,128]{1,0:T(1,128)}', space=vmem, size = 0x9000, scoped, tag = 'internal scratch']
  %s0 = inlined_call_operand.vmem [shape: bf16[8,576], index: 0, kind: input, shape index: {}]
  %s1 = inlined_call_operand.vmem [shape: bf16[576,64], index: 1, kind: input, shape index: {}]
  %s2 = inlined_call_operand.vmem [shape: f32[1,64], index: 2, kind: input, shape index: {}]
  %s3 = inlined_call_operand.vmem [shape: bf16[8,64], index: 3, kind: output, shape index: {}]
  %s4 = sld [smem:[#allocation0]]
  $region22: #{dqn_forward.6} parent=0
    _
  %s6 = ssub.s32 1, %s4
  %s7 = scalar_select 0, %s6, %s4
  // Predicated region
  $region2: #{dqn_forward.6} parent=0 // pred_check
    _
  $region3: #{dqn_forward.6} parent=0 // pred_check_branch
    %9 = sbr.rel (0) target = $region5
  $region4: #{dqn_forward.6} parent=0 // pred_region
    _
  $region5: #{dqn_forward.6} parent=0 // pred_fallthru
    _
  // Predicated region
  $region6: #{dqn_forward.6} parent=0 // pred_check
    _
  $region7: #{dqn_forward.6} parent=0 // pred_check_branch
    %11 = sbr.rel (0) target = $region9
  $region8: #{dqn_forward.6} parent=0 // pred_region
    _
  $region9: #{dqn_forward.6} parent=0 // pred_fallthru
    _
  // Predicated region
  $region10: #{dqn_forward.6} parent=0 // pred_check
    _
  $region11: #{dqn_forward.6} parent=0 // pred_check_branch
    %13 = sbr.rel (0) target = $region13
  $region12: #{dqn_forward.6} parent=0 // pred_region
    _
  $region13: #{dqn_forward.6} parent=0 // pred_fallthru
    _
  %v15 = vld [vmem:[%s0] sm:$0xff]
  %v16 = vld [vmem:[%s0 + $0x8] sm:$0xff]
  %v17 = vld [vmem:[%s0 + $0x10] sm:$0xf]
  %v18 = vld [vmem:[%s1] sm:$0xf]
  %v19 = vld [vmem:[%s1 + $0x4] sm:$0xf]
  %v20 = vld [vmem:[%s1 + $0x8] sm:$0xf]
  %v21 = vld [vmem:[%s1 + $0xc] sm:$0xf]
  %v22 = vld [vmem:[%s1 + $0x10] sm:$0xf]
  %v23 = vld [vmem:[%s1 + $0x14] sm:$0xf]
  %v24 = vld [vmem:[%s1 + $0x18] sm:$0xf]
  %v25 = vld [vmem:[%s1 + $0x1c] sm:$0xf]
  %v26 = vld [vmem:[%s1 + $0x20] sm:$0xf]
  %v27 = vld [vmem:[%s1 + $0x24] sm:$0xf]
  %v28 = vld [vmem:[%s1 + $0x28] sm:$0xf]
  %v29 = vld [vmem:[%s1 + $0x2c] sm:$0xf]
  %v30 = vld [vmem:[%s1 + $0x30] sm:$0xf]
  %v31 = vld [vmem:[%s1 + $0x34] sm:$0xf]
  %v32 = vld [vmem:[%s1 + $0x38] sm:$0xf]
  %v33 = vld [vmem:[%s1 + $0x3c] sm:$0xf]
  %v34 = vld [vmem:[%s1 + $0x40] sm:$0xf]
  %v35 = vld [vmem:[%s1 + $0x44] sm:$0xf]
  %v36 = vld [vmem:[%s1 + $0x48] sm:$0xf]
  %v37 = vld [vmem:[%s1 + $0x4c] sm:$0xf]
  %v38 = vld [vmem:[%s1 + $0x50] sm:$0xf]
  %v39 = vld [vmem:[%s1 + $0x54] sm:$0xf]
  %v40 = vld [vmem:[%s1 + $0x58] sm:$0xf]
  %v41 = vld [vmem:[%s1 + $0x5c] sm:$0xf]
  %v42 = vld [vmem:[%s1 + $0x60] sm:$0xf]
  %v43 = vld [vmem:[%s1 + $0x64] sm:$0xf]
  %v44 = vld [vmem:[%s1 + $0x68] sm:$0xf]
  %v45 = vld [vmem:[%s1 + $0x6c] sm:$0xf]
  %v46 = vld [vmem:[%s1 + $0x70] sm:$0xf]
  %v47 = vld [vmem:[%s1 + $0x74] sm:$0xf]
  %v48 = vld [vmem:[%s1 + $0x78] sm:$0xf]
  %v49 = vld [vmem:[%s1 + $0x7c] sm:$0xf]
  %v50 = vld [vmem:[%s1 + $0x80] sm:$0xf]
  %v51 = vld [vmem:[%s1 + $0x84] sm:$0xf]
  %v52 = vld [vmem:[%s1 + $0x88] sm:$0xf]
  %v53 = vld [vmem:[%s1 + $0x8c] sm:$0xf]
  %v54 = vld [vmem:[%s1 + $0x90] sm:$0xf]
  %v55 = vld [vmem:[%s1 + $0x94] sm:$0xf]
  %v56 = vld [vmem:[%s1 + $0x98] sm:$0xf]
  %v57 = vld [vmem:[%s1 + $0x9c] sm:$0xf]
  %v58 = vld [vmem:[%s1 + $0xa0] sm:$0xf]
  %v59 = vld [vmem:[%s1 + $0xa4] sm:$0xf]
  %v60 = vld [vmem:[%s1 + $0xa8] sm:$0xf]
  %v61 = vld [vmem:[%s1 + $0xac] sm:$0xf]
  %v62 = vld [vmem:[%s1 + $0xb0] sm:$0xf]
  %v63 = vld [vmem:[%s1 + $0xb4] sm:$0xf]
  %v64 = vld [vmem:[%s1 + $0xb8] sm:$0xf]
  %v65 = vld [vmem:[%s1 + $0xbc] sm:$0xf]
  %v66 = vld [vmem:[%s1 + $0xc0] sm:$0xf]
  %v67 = vld [vmem:[%s1 + $0xc4] sm:$0xf]
  %v68 = vld [vmem:[%s1 + $0xc8] sm:$0xf]
  %v69 = vld [vmem:[%s1 + $0xcc] sm:$0xf]
  %v70 = vld [vmem:[%s1 + $0xd0] sm:$0xf]
  %v71 = vld [vmem:[%s1 + $0xd4] sm:$0xf]
  %v72 = vld [vmem:[%s1 + $0xd8] sm:$0xf]
  %v73 = vld [vmem:[%s1 + $0xdc] sm:$0xf]
  %v74 = vld [vmem:[%s1 + $0xe0] sm:$0xf]
  %v75 = vld [vmem:[%s1 + $0xe4] sm:$0xf]
  %v76 = vld [vmem:[%s1 + $0xe8] sm:$0xf]
  %v77 = vld [vmem:[%s1 + $0xec] sm:$0xf]
  %v78 = vld [vmem:[%s1 + $0xf0] sm:$0xf]
  %v79 = vld [vmem:[%s1 + $0xf4] sm:$0xf]
  %v80 = vld [vmem:[%s1 + $0xf8] sm:$0xf]
  %v81 = vld [vmem:[%s1 + $0xfc] sm:$0xf]
  %v82 = vld [vmem:[%s1 + $0x100] sm:$0xf]
  %v83 = vld [vmem:[%s1 + $0x104] sm:$0xf]
  %v84 = vld [vmem:[%s1 + $0x108] sm:$0xf]
  %v85 = vld [vmem:[%s1 + $0x10c] sm:$0xf]
  %v86 = vld [vmem:[%s1 + $0x110] sm:$0xf]
  %v87 = vld [vmem:[%s1 + $0x114] sm:$0xf]
  %v88 = vld [vmem:[%s1 + $0x118] sm:$0xf]
  %v89 = vld [vmem:[%s1 + $0x11c] sm:$0xf]
  %v90 = vld [vmem:[%s2] sm:$0x1]
  %v92 = vperm.slane %v90, 0
  %v97 = vunpack.c.l.b16 %v15
  %v98 = vunpack.c.h.b16 %v15
  %v99 = vunpack.c.l.b16 %v16
  %v100 = vunpack.c.h.b16 %v16
  %v101 = vunpack.c.l.b16 %v17
  %v102 = vpack.c.b16 %v97, %v97
  %v103 = vpack.c.b16 %v98, %v98
  %v104 = vpack.c.b16 %v99, %v99
  %v105 = vpack.c.b16 %v100, %v100
  %v106 = vpack.c.b16 %v101, %v101
  %v183 = vunpack.c.l.b16 %v18
  %v184 = vunpack.c.l.b16 %v19
  %v185 = vunpack.c.l.b16 %v20
  %v186 = vunpack.c.l.b16 %v21
  %v187 = vunpack.c.l.b16 %v22
  %v188 = vunpack.c.l.b16 %v23
  %v189 = vunpack.c.l.b16 %v24
  %v190 = vunpack.c.l.b16 %v25
  %v191 = vunpack.c.l.b16 %v26
  %v192 = vunpack.c.l.b16 %v27
  %v193 = vunpack.c.l.b16 %v28
  %v194 = vunpack.c.l.b16 %v29
  %v195 = vunpack.c.l.b16 %v30
  %v196 = vunpack.c.l.b16 %v31
  %v197 = vunpack.c.l.b16 %v32
  %v198 = vunpack.c.l.b16 %v33
  %v199 = vunpack.c.l.b16 %v34
  %v200 = vunpack.c.l.b16 %v35
  %v201 = vunpack.c.l.b16 %v36
  %v202 = vunpack.c.l.b16 %v37
  %v203 = vunpack.c.l.b16 %v38
  %v204 = vunpack.c.l.b16 %v39
  %v205 = vunpack.c.l.b16 %v40
  %v206 = vunpack.c.l.b16 %v41
  %v207 = vunpack.c.l.b16 %v42
  %v208 = vunpack.c.l.b16 %v43
  %v209 = vunpack.c.l.b16 %v44
  %v210 = vunpack.c.l.b16 %v45
  %v211 = vunpack.c.l.b16 %v46
  %v212 = vunpack.c.l.b16 %v47
  %v213 = vunpack.c.l.b16 %v48
  %v214 = vunpack.c.l.b16 %v49
  %v215 = vunpack.c.l.b16 %v50
  %v216 = vunpack.c.l.b16 %v51
  %v217 = vunpack.c.l.b16 %v52
  %v218 = vunpack.c.l.b16 %v53
  %v219 = vunpack.c.l.b16 %v54
  %v220 = vunpack.c.l.b16 %v55
  %v221 = vunpack.c.l.b16 %v56
  %v222 = vunpack.c.l.b16 %v57
  %v223 = vunpack.c.l.b16 %v58
  %v224 = vunpack.c.l.b16 %v59
  %v225 = vunpack.c.l.b16 %v60
  %v226 = vunpack.c.l.b16 %v61
  %v227 = vunpack.c.l.b16 %v62
  %v228 = vunpack.c.l.b16 %v63
  %v229 = vunpack.c.l.b16 %v64
  %v230 = vunpack.c.l.b16 %v65
  %v231 = vunpack.c.l.b16 %v66
  %v232 = vunpack.c.l.b16 %v67
  %v233 = vunpack.c.l.b16 %v68
  %v234 = vunpack.c.l.b16 %v69
  %v235 = vunpack.c.l.b16 %v70
  %v236 = vunpack.c.l.b16 %v71
  %v237 = vunpack.c.l.b16 %v72
  %v238 = vunpack.c.l.b16 %v73
  %v239 = vunpack.c.l.b16 %v74
  %v240 = vunpack.c.l.b16 %v75
  %v241 = vunpack.c.l.b16 %v76
  %v242 = vunpack.c.l.b16 %v77
  %v243 = vunpack.c.l.b16 %v78
  %v244 = vunpack.c.l.b16 %v79
  %v245 = vunpack.c.l.b16 %v80
  %v246 = vunpack.c.l.b16 %v81
  %v247 = vunpack.c.l.b16 %v82
  %v248 = vunpack.c.l.b16 %v83
  %v249 = vunpack.c.l.b16 %v84
  %v250 = vunpack.c.l.b16 %v85
  %v251 = vunpack.c.l.b16 %v86
  %v252 = vunpack.c.l.b16 %v87
  %v253 = vunpack.c.l.b16 %v88
  %v254 = vunpack.c.l.b16 %v89
  %v255 = vpack.c.b16 %v184, %v183
  %v256 = vpack.c.b16 %v186, %v185
  %v257 = vpack.c.b16 %v188, %v187
  %v258 = vpack.c.b16 %v190, %v189
  %v259 = vpack.c.b16 %v192, %v191
  %v260 = vpack.c.b16 %v194, %v193
  %v261 = vpack.c.b16 %v196, %v195
  %v262 = vpack.c.b16 %v198, %v197
  %v263 = vpack.c.b16 %v200, %v199
  %v264 = vpack.c.b16 %v202, %v201
  %v265 = vpack.c.b16 %v204, %v203
  %v266 = vpack.c.b16 %v206, %v205
  %v267 = vpack.c.b16 %v208, %v207
  %v268 = vpack.c.b16 %v210, %v209
  %v269 = vpack.c.b16 %v212, %v211
  %v270 = vpack.c.b16 %v214, %v213
  %v271 = vpack.c.b16 %v216, %v215
  %v272 = vpack.c.b16 %v218, %v217
  %v273 = vpack.c.b16 %v220, %v219
  %v274 = vpack.c.b16 %v222, %v221
  %v275 = vpack.c.b16 %v224, %v223
  %v276 = vpack.c.b16 %v226, %v225
  %v277 = vpack.c.b16 %v228, %v227
  %v278 = vpack.c.b16 %v230, %v229
  %v279 = vpack.c.b16 %v232, %v231
  %v280 = vpack.c.b16 %v234, %v233
  %v281 = vpack.c.b16 %v236, %v235
  %v282 = vpack.c.b16 %v238, %v237
  %v283 = vpack.c.b16 %v240, %v239
  %v284 = vpack.c.b16 %v242, %v241
  %v285 = vpack.c.b16 %v244, %v243
  %v286 = vpack.c.b16 %v246, %v245
  %v287 = vpack.c.b16 %v248, %v247
  %v288 = vpack.c.b16 %v250, %v249
  %v289 = vpack.c.b16 %v252, %v251
  %v290 = vpack.c.b16 %v254, %v253
  %vm327 = vcmask 523264
  %v329 = vsel %vm327, %v106, 0
  %331 = vmatpush.bf16.msra.mxu0 %v262
  %332 = vmatpush.bf16.msra.mxu0 %v261
  %333 = vmatpush.bf16.msra.mxu0 %v260
  %334 = vmatpush.bf16.msra.mxu0 %v259
  %335 = vmatpush.bf16.msra.mxu0 %v258
  %336 = vmatpush.bf16.msra.mxu0 %v257
  %337 = vmatpush.bf16.msra.mxu0 %v256
  %338 = vmatpush.bf16.msra.mxu0 %v255
  %339 = vmatmul.bf16.gmra.mxu0 %v102
  %v340 = vpop.f32.mrf.mxu0
  %v341 = vadd.f32 %v92, %v340
  %v342 = vpop.f32.mrf.mxu0
  %343 = vdwg.mxu0
  %344 = vmatpush.bf16.msra.mxu0 %v270
  %345 = vmatpush.bf16.msra.mxu0 %v269
  %346 = vmatpush.bf16.msra.mxu0 %v268
  %347 = vmatpush.bf16.msra.mxu0 %v267
  %348 = vmatpush.bf16.msra.mxu0 %v266
  %349 = vmatpush.bf16.msra.mxu0 %v265
  %350 = vmatpush.bf16.msra.mxu0 %v264
  %351 = vmatpush.bf16.msra.mxu0 %v263
  %352 = vmatmul.bf16.gmra.mxu0 %v103
  %v353 = vpop.f32.mrf.mxu0
  %v354 = vadd.f32 %v341, %v353
  %v355 = vpop.f32.mrf.mxu0
  %356 = vdwg.mxu0
  %357 = vmatpush.bf16.msra.mxu0 %v278
  %358 = vmatpush.bf16.msra.mxu0 %v277
  %359 = vmatpush.bf16.msra.mxu0 %v276
  %360 = vmatpush.bf16.msra.mxu0 %v275
  %361 = vmatpush.bf16.msra.mxu0 %v274
  %362 = vmatpush.bf16.msra.mxu0 %v273
  %363 = vmatpush.bf16.msra.mxu0 %v272
  %364 = vmatpush.bf16.msra.mxu0 %v271
  %365 = vmatmul.bf16.gmra.mxu0 %v104
  %v366 = vpop.f32.mrf.mxu0
  %v367 = vadd.f32 %v354, %v366
  %v368 = vpop.f32.mrf.mxu0
  %369 = vdwg.mxu0
  %370 = vmatpush.bf16.msra.mxu0 %v286
  %371 = vmatpush.bf16.msra.mxu0 %v285
  %372 = vmatpush.bf16.msra.mxu0 %v284
  %373 = vmatpush.bf16.msra.mxu0 %v283
  %374 = vmatpush.bf16.msra.mxu0 %v282
  %375 = vmatpush.bf16.msra.mxu0 %v281
  %376 = vmatpush.bf16.msra.mxu0 %v280
  %377 = vmatpush.bf16.msra.mxu0 %v279
  %378 = vmatmul.bf16.gmra.mxu0 %v105
  %v379 = vpop.f32.mrf.mxu0
  %v380 = vadd.f32 %v367, %v379
  %v381 = vpop.f32.mrf.mxu0
  %382 = vdwg.mxu0
  %383 = vmatpush.bf16.msra.mxu0 0
  %384 = vmatpush.bf16.msra.mxu0 0
  %385 = vmatpush.bf16.msra.mxu0 0
  %386 = vmatpush.bf16.msra.mxu0 0
  %387 = vmatpush.bf16.msra.mxu0 %v290
  %388 = vmatpush.bf16.msra.mxu0 %v289
  %389 = vmatpush.bf16.msra.mxu0 %v288
  %390 = vmatpush.bf16.msra.mxu0 %v287
  %391 = vmatmul.bf16.gmra.mxu0 %v329
  %v392 = vpop.f32.mrf.mxu0
  %v393 = vadd.f32 %v380, %v392
  %v394 = vpop.f32.mrf.mxu0
  %395 = vdwg.mxu0
  %v396 = vmax.f32 %v393, 0.0
  %v397 = vpack.c.bf16 %v396, %v396
  %vm398 = vcmask 519168
  %399 = vst.msk [vmem:[%s3] sm:$0xf] %vm398, %v397
  // Predicated region
  $region14: #{dqn_forward.6} parent=0 // pred_check
    _
  $region15: #{dqn_forward.6} parent=0 // pred_check_branch
    %401 = sbr.rel (0) target = $region17
  $region16: #{dqn_forward.6} parent=0 // pred_region
    _
  $region17: #{dqn_forward.6} parent=0 // pred_fallthru
    _
  // Predicated region
  $region18: #{dqn_forward.6} parent=0 // pred_check
    _
  $region19: #{dqn_forward.6} parent=0 // pred_check_branch
    %403 = sbr.rel (0) target = $region21
  $region20: #{dqn_forward.6} parent=0 // pred_region
    _
  $region21: #{dqn_forward.6} parent=0 // pred_fallthru
    _

// kernel: dqn_forward.7
$region0: #{dqn_forward.7}
  #allocation0 [shape = 'u32[]', space=smem, size = 0x4, offset = 0x4, fixed_abs, tag = 'smem constant byte address 0x4 - core index']
  #allocation1 [shape = 'u32[72,128]{1,0:T(1,128)}', space=vmem, size = 0x9000, scoped, tag = 'internal scratch']
  %s0 = inlined_call_operand.vmem [shape: bf16[2,256], index: 0, kind: input, shape index: {}]
  %s1 = inlined_call_operand.vmem [shape: bf16[256,1024], index: 1, kind: input, shape index: {}]
  %s2 = inlined_call_operand.vmem [shape: f32[1,1024], index: 2, kind: input, shape index: {}]
  %s3 = inlined_call_operand.vmem [shape: bf16[1024,256], index: 3, kind: input, shape index: {}]
  %s4 = inlined_call_operand.vmem [shape: f32[1,256], index: 4, kind: input, shape index: {}]
  %s5 = inlined_call_operand.hbm [shape: f32[2,4,51], index: 5, kind: output, shape index: {}]
  %s6 = sld [smem:[#allocation0]]
  $region30: #{dqn_forward.7} parent=0
    _
  %s8 = ssub.s32 1, %s6
  %s9 = scalar_select 0, %s8, %s6
  $region1: #{dqn_forward.7} parent=0
    #allocation2 [shape = 'u8[4096]{0}', space=vmem, size = 0x1000, scoped, tag = 'output window, operand 0, single buffered']
    #allocation3 [shape = 's32[1]{0}', space=sflag, size = 0x4, scoped, tag = 'scoped memory for dqn_forward.7']
    %10 = vsyncpa [#allocation3], 0
    // Predicated region
    $region2: #{dqn_forward.7} parent=1 // pred_check
      _
    $region3: #{dqn_forward.7} parent=1 // pred_check_branch
      %12 = sbr.rel (0) target = $region5
    $region4: #{dqn_forward.7} parent=1 // pred_region
      _
    $region5: #{dqn_forward.7} parent=1 // pred_fallthru
      _
    // Predicated region
    $region6: #{dqn_forward.7} parent=1 // pred_check
      _
    $region7: #{dqn_forward.7} parent=1 // pred_check_branch
      %14 = sbr.rel (0) target = $region9
    $region8: #{dqn_forward.7} parent=1 // pred_region
      _
    $region9: #{dqn_forward.7} parent=1 // pred_fallthru
      _
    // Predicated region
    $region10: #{dqn_forward.7} parent=1 // pred_check
      _
    $region11: #{dqn_forward.7} parent=1 // pred_check_branch
      %16 = sbr.rel (0) target = $region13
    $region12: #{dqn_forward.7} parent=1 // pred_region
      _
    $region13: #{dqn_forward.7} parent=1 // pred_fallthru
      _
    // Predicated region
    $region14: #{dqn_forward.7} parent=1 // pred_check
      _
    $region15: #{dqn_forward.7} parent=1 // pred_check_branch
      %18 = sbr.rel (0) target = $region17
    $region16: #{dqn_forward.7} parent=1 // pred_region
      _
    $region17: #{dqn_forward.7} parent=1 // pred_fallthru
      _
    // Predicated region
    $region18: #{dqn_forward.7} parent=1 // pred_check
      _
    $region19: #{dqn_forward.7} parent=1 // pred_check_branch
      %20 = sbr.rel (0) target = $region21
    $region20: #{dqn_forward.7} parent=1 // pred_region
      _
    $region21: #{dqn_forward.7} parent=1 // pred_fallthru
      _
    %v21 = vld [vmem:[%s0] sm:$0x3]
    %v22 = vld [vmem:[%s1] sm:$0xff]
    %v23 = vld [vmem:[%s1 + $0x8] sm:$0xff]
    %v24 = vld [vmem:[%s1 + $0x10] sm:$0xff]
    %v25 = vld [vmem:[%s1 + $0x18] sm:$0xff]
    %v26 = vld [vmem:[%s1 + $0x20] sm:$0xff]
    %v27 = vld [vmem:[%s1 + $0x28] sm:$0xff]
    %v28 = vld [vmem:[%s1 + $0x30] sm:$0xff]
    %v29 = vld [vmem:[%s1 + $0x38] sm:$0xff]
    %v30 = vld [vmem:[%s1 + $0x40] sm:$0xff]
    %v31 = vld [vmem:[%s1 + $0x48] sm:$0xff]
    %v32 = vld [vmem:[%s1 + $0x50] sm:$0xff]
    %v33 = vld [vmem:[%s1 + $0x58] sm:$0xff]
    %v34 = vld [vmem:[%s1 + $0x60] sm:$0xff]
    %v35 = vld [vmem:[%s1 + $0x68] sm:$0xff]
    %v36 = vld [vmem:[%s1 + $0x70] sm:$0xff]
    %v37 = vld [vmem:[%s1 + $0x78] sm:$0xff]
    %v38 = vld [vmem:[%s1 + $0x80] sm:$0xff]
    %v39 = vld [vmem:[%s1 + $0x88] sm:$0xff]
    %v40 = vld [vmem:[%s1 + $0x90] sm:$0xff]
    %v41 = vld [vmem:[%s1 + $0x98] sm:$0xff]
    %v42 = vld [vmem:[%s1 + $0xa0] sm:$0xff]
    %v43 = vld [vmem:[%s1 + $0xa8] sm:$0xff]
    %v44 = vld [vmem:[%s1 + $0xb0] sm:$0xff]
    %v45 = vld [vmem:[%s1 + $0xb8] sm:$0xff]
    %v46 = vld [vmem:[%s1 + $0xc0] sm:$0xff]
    %v47 = vld [vmem:[%s1 + $0xc8] sm:$0xff]
    %v48 = vld [vmem:[%s1 + $0xd0] sm:$0xff]
    %v49 = vld [vmem:[%s1 + $0xd8] sm:$0xff]
    %v50 = vld [vmem:[%s1 + $0xe0] sm:$0xff]
    %v51 = vld [vmem:[%s1 + $0xe8] sm:$0xff]
    %v52 = vld [vmem:[%s1 + $0xf0] sm:$0xff]
    %v53 = vld [vmem:[%s1 + $0xf8] sm:$0xff]
    %v54 = vld [vmem:[%s1 + $0x100] sm:$0xff]
    %v55 = vld [vmem:[%s1 + $0x108] sm:$0xff]
    %v56 = vld [vmem:[%s1 + $0x110] sm:$0xff]
    %v57 = vld [vmem:[%s1 + $0x118] sm:$0xff]
    %v58 = vld [vmem:[%s1 + $0x120] sm:$0xff]
    %v59 = vld [vmem:[%s1 + $0x128] sm:$0xff]
    %v60 = vld [vmem:[%s1 + $0x130] sm:$0xff]
    %v61 = vld [vmem:[%s1 + $0x138] sm:$0xff]
    %v62 = vld [vmem:[%s1 + $0x140] sm:$0xff]
    %v63 = vld [vmem:[%s1 + $0x148] sm:$0xff]
    %v64 = vld [vmem:[%s1 + $0x150] sm:$0xff]
    %v65 = vld [vmem:[%s1 + $0x158] sm:$0xff]
    %v66 = vld [vmem:[%s1 + $0x160] sm:$0xff]
    %v67 = vld [vmem:[%s1 + $0x168] sm:$0xff]
    %v68 = vld [vmem:[%s1 + $0x170] sm:$0xff]
    %v69 = vld [vmem:[%s1 + $0x178] sm:$0xff]
    %v70 = vld [vmem:[%s1 + $0x180] sm:$0xff]
    %v71 = vld [vmem:[%s1 + $0x188] sm:$0xff]
    %v72 = vld [vmem:[%s1 + $0x190] sm:$0xff]
    %v73 = vld [vmem:[%s1 + $0x198] sm:$0xff]
    %v74 = vld [vmem:[%s1 + $0x1a0] sm:$0xff]
    %v75 = vld [vmem:[%s1 + $0x1a8] sm:$0xff]
    %v76 = vld [vmem:[%s1 + $0x1b0] sm:$0xff]
    %v77 = vld [vmem:[%s1 + $0x1b8] sm:$0xff]
    %v78 = vld [vmem:[%s1 + $0x1c0] sm:$0xff]
    %v79 = vld [vmem:[%s1 + $0x1c8] sm:$0xff]
    %v80 = vld [vmem:[%s1 + $0x1d0] sm:$0xff]
    %v81 = vld [vmem:[%s1 + $0x1d8] sm:$0xff]
    %v82 = vld [vmem:[%s1 + $0x1e0] sm:$0xff]
    %v83 = vld [vmem:[%s1 + $0x1e8] sm:$0xff]
    %v84 = vld [vmem:[%s1 + $0x1f0] sm:$0xff]
    %v85 = vld [vmem:[%s1 + $0x1f8] sm:$0xff]
    %v86 = vld [vmem:[%s1 + $0x200] sm:$0xff]
    %v87 = vld [vmem:[%s1 + $0x208] sm:$0xff]
    %v88 = vld [vmem:[%s1 + $0x210] sm:$0xff]
    %v89 = vld [vmem:[%s1 + $0x218] sm:$0xff]
    %v90 = vld [vmem:[%s1 + $0x220] sm:$0xff]
    %v91 = vld [vmem:[%s1 + $0x228] sm:$0xff]
    %v92 = vld [vmem:[%s1 + $0x230] sm:$0xff]
    %v93 = vld [vmem:[%s1 + $0x238] sm:$0xff]
    %v94 = vld [vmem:[%s1 + $0x240] sm:$0xff]
    %v95 = vld [vmem:[%s1 + $0x248] sm:$0xff]
    %v96 = vld [vmem:[%s1 + $0x250] sm:$0xff]
    %v97 = vld [vmem:[%s1 + $0x258] sm:$0xff]
    %v98 = vld [vmem:[%s1 + $0x260] sm:$0xff]
    %v99 = vld [vmem:[%s1 + $0x268] sm:$0xff]
    %v100 = vld [vmem:[%s1 + $0x270] sm:$0xff]
    %v101 = vld [vmem:[%s1 + $0x278] sm:$0xff]
    %v102 = vld [vmem:[%s1 + $0x280] sm:$0xff]
    %v103 = vld [vmem:[%s1 + $0x288] sm:$0xff]
    %v104 = vld [vmem:[%s1 + $0x290] sm:$0xff]
    %v105 = vld [vmem:[%s1 + $0x298] sm:$0xff]
    %v106 = vld [vmem:[%s1 + $0x2a0] sm:$0xff]
    %v107 = vld [vmem:[%s1 + $0x2a8] sm:$0xff]
    %v108 = vld [vmem:[%s1 + $0x2b0] sm:$0xff]
    %v109 = vld [vmem:[%s1 + $0x2b8] sm:$0xff]
    %v110 = vld [vmem:[%s1 + $0x2c0] sm:$0xff]
    %v111 = vld [vmem:[%s1 + $0x2c8] sm:$0xff]
    %v112 = vld [vmem:[%s1 + $0x2d0] sm:$0xff]
    %v113 = vld [vmem:[%s1 + $0x2d8] sm:$0xff]
    %v114 = vld [vmem:[%s1 + $0x2e0] sm:$0xff]
    %v115 = vld [vmem:[%s1 + $0x2e8] sm:$0xff]
    %v116 = vld [vmem:[%s1 + $0x2f0] sm:$0xff]
    %v117 = vld [vmem:[%s1 + $0x2f8] sm:$0xff]
    %v118 = vld [vmem:[%s1 + $0x300] sm:$0xff]
    %v119 = vld [vmem:[%s1 + $0x308] sm:$0xff]
    %v120 = vld [vmem:[%s1 + $0x310] sm:$0xff]
    %v121 = vld [vmem:[%s1 + $0x318] sm:$0xff]
    %v122 = vld [vmem:[%s1 + $0x320] sm:$0xff]
    %v123 = vld [vmem:[%s1 + $0x328] sm:$0xff]
    %v124 = vld [vmem:[%s1 + $0x330] sm:$0xff]
    %v125 = vld [vmem:[%s1 + $0x338] sm:$0xff]
    %v126 = vld [vmem:[%s1 + $0x340] sm:$0xff]
    %v127 = vld [vmem:[%s1 + $0x348] sm:$0xff]
    %v128 = vld [vmem:[%s1 + $0x350] sm:$0xff]
    %v129 = vld [vmem:[%s1 + $0x358] sm:$0xff]
    %v130 = vld [vmem:[%s1 + $0x360] sm:$0xff]
    %v131 = vld [vmem:[%s1 + $0x368] sm:$0xff]
    %v132 = vld [vmem:[%s1 + $0x370] sm:$0xff]
    %v133 = vld [vmem:[%s1 + $0x378] sm:$0xff]
    %v134 = vld [vmem:[%s1 + $0x380] sm:$0xff]
    %v135 = vld [vmem:[%s1 + $0x388] sm:$0xff]
    %v136 = vld [vmem:[%s1 + $0x390] sm:$0xff]
    %v137 = vld [vmem:[%s1 + $0x398] sm:$0xff]
    %v138 = vld [vmem:[%s1 + $0x3a0] sm:$0xff]
    %v139 = vld [vmem:[%s1 + $0x3a8] sm:$0xff]
    %v140 = vld [vmem:[%s1 + $0x3b0] sm:$0xff]
    %v141 = vld [vmem:[%s1 + $0x3b8] sm:$0xff]
    %v142 = vld [vmem:[%s1 + $0x3c0] sm:$0xff]
    %v143 = vld [vmem:[%s1 + $0x3c8] sm:$0xff]
    %v144 = vld [vmem:[%s1 + $0x3d0] sm:$0xff]
    %v145 = vld [vmem:[%s1 + $0x3d8] sm:$0xff]
    %v146 = vld [vmem:[%s1 + $0x3e0] sm:$0xff]
    %v147 = vld [vmem:[%s1 + $0x3e8] sm:$0xff]
    %v148 = vld [vmem:[%s1 + $0x3f0] sm:$0xff]
    %v149 = vld [vmem:[%s1 + $0x3f8] sm:$0xff]
    %v150 = vld [vmem:[%s2] sm:$0xff]
    %v152 = vperm.slane %v150, 0
    %v153 = vperm.slane %v150, 1
    %v154 = vperm.slane %v150, 2
    %v155 = vperm.slane %v150, 3
    %v156 = vperm.slane %v150, 4
    %v157 = vperm.slane %v150, 5
    %v158 = vperm.slane %v150, 6
    %v159 = vperm.slane %v150, 7
    %169 = vst [vmem:[#allocation1] ss:$9 sm:$0xff] %v21
    %v170 = vld [vmem:[#allocation1] sm:$0xff]
    %v171 = vld [vmem:[#allocation1 + $0x9] sm:$0xff]
    %v302 = vunpack.c.l.b16 %v22
    %v303 = vunpack.c.h.b16 %v22
    %v304 = vunpack.c.l.b16 %v23
    %v305 = vunpack.c.h.b16 %v23
    %v306 = vunpack.c.l.b16 %v24
    %v307 = vunpack.c.h.b16 %v24
    %v308 = vunpack.c.l.b16 %v25
    %v309 = vunpack.c.h.b16 %v25
    %v310 = vunpack.c.l.b16 %v26
    %v311 = vunpack.c.h.b16 %v26
    %v312 = vunpack.c.l.b16 %v27
    %v313 = vunpack.c.h.b16 %v27
    %v314 = vunpack.c.l.b16 %v28
    %v315 = vunpack.c.h.b16 %v28
    %v316 = vunpack.c.l.b16 %v29
    %v317 = vunpack.c.h.b16 %v29
    %v318 = vunpack.c.l.b16 %v30
    %v319 = vunpack.c.h.b16 %v30
    %v320 = vunpack.c.l.b16 %v31
    %v321 = vunpack.c.h.b16 %v31
    %v322 = vunpack.c.l.b16 %v32
    %v323 = vunpack.c.h.b16 %v32
    %v324 = vunpack.c.l.b16 %v33
    %v325 = vunpack.c.h.b16 %v33
    %v326 = vunpack.c.l.b16 %v34
    %v327 = vunpack.c.h.b16 %v34
    %v328 = vunpack.c.l.b16 %v35
    %v329 = vunpack.c.h.b16 %v35
    %v330 = vunpack.c.l.b16 %v36
    %v331 = vunpack.c.h.b16 %v36
    %v332 = vunpack.c.l.b16 %v37
    %v333 = vunpack.c.h.b16 %v37
    %v334 = vunpack.c.l.b16 %v38
    %v335 = vunpack.c.h.b16 %v38
    %v336 = vunpack.c.l.b16 %v39
    %v337 = vunpack.c.h.b16 %v39
    %v338 = vunpack.c.l.b16 %v40
    %v339 = vunpack.c.h.b16 %v40
    %v340 = vunpack.c.l.b16 %v41
    %v341 = vunpack.c.h.b16 %v41
    %v342 = vunpack.c.l.b16 %v42
    %v343 = vunpack.c.h.b16 %v42
    %v344 = vunpack.c.l.b16 %v43
    %v345 = vunpack.c.h.b16 %v43
    %v346 = vunpack.c.l.b16 %v44
    %v347 = vunpack.c.h.b16 %v44
    %v348 = vunpack.c.l.b16 %v45
    %v349 = vunpack.c.h.b16 %v45
    %v350 = vunpack.c.l.b16 %v46
    %v351 = vunpack.c.h.b16 %v46
    %v352 = vunpack.c.l.b16 %v47
    %v353 = vunpack.c.h.b16 %v47
    %v354 = vunpack.c.l.b16 %v48
    %v355 = vunpack.c.h.b16 %v48
    %v356 = vunpack.c.l.b16 %v49
    %v357 = vunpack.c.h.b16 %v49
    %v358 = vunpack.c.l.b16 %v50
    %v359 = vunpack.c.h.b16 %v50
    %v360 = vunpack.c.l.b16 %v51
    %v361 = vunpack.c.h.b16 %v51
    %v362 = vunpack.c.l.b16 %v52
    %v363 = vunpack.c.h.b16 %v52
    %v364 = vunpack.c.l.b16 %v53
    %v365 = vunpack.c.h.b16 %v53
    %v366 = vunpack.c.l.b16 %v54
    %v367 = vunpack.c.h.b16 %v54
    %v368 = vunpack.c.l.b16 %v55
    %v369 = vunpack.c.h.b16 %v55
    %v370 = vunpack.c.l.b16 %v56
    %v371 = vunpack.c.h.b16 %v56
    %v372 = vunpack.c.l.b16 %v57
    %v373 = vunpack.c.h.b16 %v57
    %v374 = vunpack.c.l.b16 %v58
    %v375 = vunpack.c.h.b16 %v58
    %v376 = vunpack.c.l.b16 %v59
    %v377 = vunpack.c.h.b16 %v59
    %v378 = vunpack.c.l.b16 %v60
    %v379 = vunpack.c.h.b16 %v60
    %v380 = vunpack.c.l.b16 %v61
    %v381 = vunpack.c.h.b16 %v61
    %v382 = vunpack.c.l.b16 %v62
    %v383 = vunpack.c.h.b16 %v62
    %v384 = vunpack.c.l.b16 %v63
    %v385 = vunpack.c.h.b16 %v63
    %v386 = vunpack.c.l.b16 %v64
    %v387 = vunpack.c.h.b16 %v64
    %v388 = vunpack.c.l.b16 %v65
    %v389 = vunpack.c.h.b16 %v65
    %v390 = vunpack.c.l.b16 %v66
    %v391 = vunpack.c.h.b16 %v66
    %v392 = vunpack.c.l.b16 %v67
    %v393 = vunpack.c.h.b16 %v67
    %v394 = vunpack.c.l.b16 %v68
    %v395 = vunpack.c.h.b16 %v68
    %v396 = vunpack.c.l.b16 %v69
    %v397 = vunpack.c.h.b16 %v69
    %v398 = vunpack.c.l.b16 %v70
    %v399 = vunpack.c.h.b16 %v70
    %v400 = vunpack.c.l.b16 %v71
    %v401 = vunpack.c.h.b16 %v71
    %v402 = vunpack.c.l.b16 %v72
    %v403 = vunpack.c.h.b16 %v72
    %v404 = vunpack.c.l.b16 %v73
    %v405 = vunpack.c.h.b16 %v73
    %v406 = vunpack.c.l.b16 %v74
    %v407 = vunpack.c.h.b16 %v74
    %v408 = vunpack.c.l.b16 %v75
    %v409 = vunpack.c.h.b16 %v75
    %v410 = vunpack.c.l.b16 %v76
    %v411 = vunpack.c.h.b16 %v76
    %v412 = vunpack.c.l.b16 %v77
    %v413 = vunpack.c.h.b16 %v77
    %v414 = vunpack.c.l.b16 %v78
    %v415 = vunpack.c.h.b16 %v78
    %v416 = vunpack.c.l.b16 %v79
    %v417 = vunpack.c.h.b16 %v79
    %v418 = vunpack.c.l.b16 %v80
    %v419 = vunpack.c.h.b16 %v80
    %v420 = vunpack.c.l.b16 %v81
    %v421 = vunpack.c.h.b16 %v81
    %v422 = vunpack.c.l.b16 %v82
    %v423 = vunpack.c.h.b16 %v82
    %v424 = vunpack.c.l.b16 %v83
    %v425 = vunpack.c.h.b16 %v83
    %v426 = vunpack.c.l.b16 %v84
    %v427 = vunpack.c.h.b16 %v84
    %v428 = vunpack.c.l.b16 %v85
    %v429 = vunpack.c.h.b16 %v85
    %v430 = vunpack.c.l.b16 %v86
    %v431 = vunpack.c.h.b16 %v86
    %v432 = vunpack.c.l.b16 %v87
    %v433 = vunpack.c.h.b16 %v87
    %v434 = vunpack.c.l.b16 %v88
    %v435 = vunpack.c.h.b16 %v88
    %v436 = vunpack.c.l.b16 %v89
    %v437 = vunpack.c.h.b16 %v89
    %v438 = vunpack.c.l.b16 %v90
    %v439 = vunpack.c.h.b16 %v90
    %v440 = vunpack.c.l.b16 %v91
    %v441 = vunpack.c.h.b16 %v91
    %v442 = vunpack.c.l.b16 %v92
    %v443 = vunpack.c.h.b16 %v92
    %v444 = vunpack.c.l.b16 %v93
    %v445 = vunpack.c.h.b16 %v93
    %v446 = vunpack.c.l.b16 %v94
    %v447 = vunpack.c.h.b16 %v94
    %v448 = vunpack.c.l.b16 %v95
    %v449 = vunpack.c.h.b16 %v95
    %v450 = vunpack.c.l.b16 %v96
    %v451 = vunpack.c.h.b16 %v96
    %v452 = vunpack.c.l.b16 %v97
    %v453 = vunpack.c.h.b16 %v97
    %v454 = vunpack.c.l.b16 %v98
    %v455 = vunpack.c.h.b16 %v98
    %v456 = vunpack.c.l.b16 %v99
    %v457 = vunpack.c.h.b16 %v99
    %v458 = vunpack.c.l.b16 %v100
    %v459 = vunpack.c.h.b16 %v100
    %v460 = vunpack.c.l.b16 %v101
    %v461 = vunpack.c.h.b16 %v101
    %v462 = vunpack.c.l.b16 %v102
    %v463 = vunpack.c.h.b16 %v102
    %v464 = vunpack.c.l.b16 %v103
    %v465 = vunpack.c.h.b16 %v103
    %v466 = vunpack.c.l.b16 %v104
    %v467 = vunpack.c.h.b16 %v104
    %v468 = vunpack.c.l.b16 %v105
    %v469 = vunpack.c.h.b16 %v105
    %v470 = vunpack.c.l.b16 %v106
    %v471 = vunpack.c.h.b16 %v106
    %v472 = vunpack.c.l.b16 %v107
    %v473 = vunpack.c.h.b16 %v107
    %v474 = vunpack.c.l.b16 %v108
    %v475 = vunpack.c.h.b16 %v108
    %v476 = vunpack.c.l.b16 %v109
    %v477 = vunpack.c.h.b16 %v109
    %v478 = vunpack.c.l.b16 %v110
    %v479 = vunpack.c.h.b16 %v110
    %v480 = vunpack.c.l.b16 %v111
    %v481 = vunpack.c.h.b16 %v111
    %v482 = vunpack.c.l.b16 %v112
    %v483 = vunpack.c.h.b16 %v112
    %v484 = vunpack.c.l.b16 %v113
    %v485 = vunpack.c.h.b16 %v113
    %v486 = vunpack.c.l.b16 %v114
    %v487 = vunpack.c.h.b16 %v114
    %v488 = vunpack.c.l.b16 %v115
    %v489 = vunpack.c.h.b16 %v115
    %v490 = vunpack.c.l.b16 %v116
    %v491 = vunpack.c.h.b16 %v116
    %v492 = vunpack.c.l.b16 %v117
    %v493 = vunpack.c.h.b16 %v117
    %v494 = vunpack.c.l.b16 %v118
    %v495 = vunpack.c.h.b16 %v118
    %v496 = vunpack.c.l.b16 %v119
    %v497 = vunpack.c.h.b16 %v119
    %v498 = vunpack.c.l.b16 %v120
    %v499 = vunpack.c.h.b16 %v120
    %v500 = vunpack.c.l.b16 %v121
    %v501 = vunpack.c.h.b16 %v121
    %v502 = vunpack.c.l.b16 %v122
    %v503 = vunpack.c.h.b16 %v122
    %v504 = vunpack.c.l.b16 %v123
    %v505 = vunpack.c.h.b16 %v123
    %v506 = vunpack.c.l.b16 %v124
    %v507 = vunpack.c.h.b16 %v124
    %v508 = vunpack.c.l.b16 %v125
    %v509 = vunpack.c.h.b16 %v125
    %v510 = vunpack.c.l.b16 %v126
    %v511 = vunpack.c.h.b16 %v126
    %v512 = vunpack.c.l.b16 %v127
    %v513 = vunpack.c.h.b16 %v127
    %v514 = vunpack.c.l.b16 %v128
    %v515 = vunpack.c.h.b16 %v128
    %v516 = vunpack.c.l.b16 %v129
    %v517 = vunpack.c.h.b16 %v129
    %v518 = vunpack.c.l.b16 %v130
    %v519 = vunpack.c.h.b16 %v130
    %v520 = vunpack.c.l.b16 %v131
    %v521 = vunpack.c.h.b16 %v131
    %v522 = vunpack.c.l.b16 %v132
    %v523 = vunpack.c.h.b16 %v132
    %v524 = vunpack.c.l.b16 %v133
    %v525 = vunpack.c.h.b16 %v133
    %v526 = vunpack.c.l.b16 %v134
    %v527 = vunpack.c.h.b16 %v134
    %v528 = vunpack.c.l.b16 %v135
    %v529 = vunpack.c.h.b16 %v135
    %v530 = vunpack.c.l.b16 %v136
    %v531 = vunpack.c.h.b16 %v136
    %v532 = vunpack.c.l.b16 %v137
    %v533 = vunpack.c.h.b16 %v137
    %v534 = vunpack.c.l.b16 %v138
    %v535 = vunpack.c.h.b16 %v138
    %v536 = vunpack.c.l.b16 %v139
    %v537 = vunpack.c.h.b16 %v139
    %v538 = vunpack.c.l.b16 %v140
    %v539 = vunpack.c.h.b16 %v140
    %v540 = vunpack.c.l.b16 %v141
    %v541 = vunpack.c.h.b16 %v141
    %v542 = vunpack.c.l.b16 %v142
    %v543 = vunpack.c.h.b16 %v142
    %v544 = vunpack.c.l.b16 %v143
    %v545 = vunpack.c.h.b16 %v143
    %v546 = vunpack.c.l.b16 %v144
    %v547 = vunpack.c.h.b16 %v144
    %v548 = vunpack.c.l.b16 %v145
    %v549 = vunpack.c.h.b16 %v145
    %v550 = vunpack.c.l.b16 %v146
    %v551 = vunpack.c.h.b16 %v146
    %v552 = vunpack.c.l.b16 %v147
    %v553 = vunpack.c.h.b16 %v147
    %v554 = vunpack.c.l.b16 %v148
    %v555 = vunpack.c.h.b16 %v148
    %v556 = vunpack.c.l.b16 %v149
    %v557 = vunpack.c.h.b16 %v149
    %v558 = vpack.c.b16 %v310, %v302
    %v559 = vpack.c.b16 %v311, %v303
    %v560 = vpack.c.b16 %v312, %v304
    %v561 = vpack.c.b16 %v313, %v305
    %v562 = vpack.c.b16 %v314, %v306
    %v563 = vpack.c.b16 %v315, %v307
    %v564 = vpack.c.b16 %v316, %v308
    %v565 = vpack.c.b16 %v317, %v309
    %v566 = vpack.c.b16 %v326, %v318
    %v567 = vpack.c.b16 %v327, %v319
    %v568 = vpack.c.b16 %v328, %v320
    %v569 = vpack.c.b16 %v329, %v321
    %v570 = vpack.c.b16 %v330, %v322
    %v571 = vpack.c.b16 %v331, %v323
    %v572 = vpack.c.b16 %v332, %v324
    %v573 = vpack.c.b16 %v333, %v325
    %v574 = vpack.c.b16 %v342, %v334
    %v575 = vpack.c.b16 %v343, %v335
    %v576 = vpack.c.b16 %v344, %v336
    %v577 = vpack.c.b16 %v345, %v337
    %v578 = vpack.c.b16 %v346, %v338
    %v579 = vpack.c.b16 %v347, %v339
    %v580 = vpack.c.b16 %v348, %v340
    %v581 = vpack.c.b16 %v349, %v341
    %v582 = vpack.c.b16 %v358, %v350
    %v583 = vpack.c.b16 %v359, %v351
    %v584 = vpack.c.b16 %v360, %v352
    %v585 = vpack.c.b16 %v361, %v353
    %v586 = vpack.c.b16 %v362, %v354
    %v587 = vpack.c.b16 %v363, %v355
    %v588 = vpack.c.b16 %v364, %v356
    %v589 = vpack.c.b16 %v365, %v357
    %v590 = vpack.c.b16 %v374, %v366
    %v591 = vpack.c.b16 %v375, %v367
    %v592 = vpack.c.b16 %v376, %v368
    %v593 = vpack.c.b16 %v377, %v369
    %v594 = vpack.c.b16 %v378, %v370
    %v595 = vpack.c.b16 %v379, %v371
    %v596 = vpack.c.b16 %v380, %v372
    %v597 = vpack.c.b16 %v381, %v373
    %v598 = vpack.c.b16 %v390, %v382
    %v599 = vpack.c.b16 %v391, %v383
    %v600 = vpack.c.b16 %v392, %v384
    %v601 = vpack.c.b16 %v393, %v385
    %v602 = vpack.c.b16 %v394, %v386
    %v603 = vpack.c.b16 %v395, %v387
    %v604 = vpack.c.b16 %v396, %v388
    %v605 = vpack.c.b16 %v397, %v389
    %v606 = vpack.c.b16 %v406, %v398
    %v607 = vpack.c.b16 %v407, %v399
    %v608 = vpack.c.b16 %v408, %v400
    %v609 = vpack.c.b16 %v409, %v401
    %v610 = vpack.c.b16 %v410, %v402
    %v611 = vpack.c.b16 %v411, %v403
    %v612 = vpack.c.b16 %v412, %v404
    %v613 = vpack.c.b16 %v413, %v405
    %v614 = vpack.c.b16 %v422, %v414
    %v615 = vpack.c.b16 %v423, %v415
    %v616 = vpack.c.b16 %v424, %v416
    %v617 = vpack.c.b16 %v425, %v417
    %v618 = vpack.c.b16 %v426, %v418
    %v619 = vpack.c.b16 %v427, %v419
    %v620 = vpack.c.b16 %v428, %v420
    %v621 = vpack.c.b16 %v429, %v421
    %v622 = vpack.c.b16 %v438, %v430
    %v623 = vpack.c.b16 %v439, %v431
    %v624 = vpack.c.b16 %v440, %v432
    %v625 = vpack.c.b16 %v441, %v433
    %v626 = vpack.c.b16 %v442, %v434
    %v627 = vpack.c.b16 %v443, %v435
    %v628 = vpack.c.b16 %v444, %v436
    %v629 = vpack.c.b16 %v445, %v437
    %v630 = vpack.c.b16 %v454, %v446
    %v631 = vpack.c.b16 %v455, %v447
    %v632 = vpack.c.b16 %v456, %v448
    %v633 = vpack.c.b16 %v457, %v449
    %v634 = vpack.c.b16 %v458, %v450
    %v635 = vpack.c.b16 %v459, %v451
    %v636 = vpack.c.b16 %v460, %v452
    %v637 = vpack.c.b16 %v461, %v453
    %v638 = vpack.c.b16 %v470, %v462
    %v639 = vpack.c.b16 %v471, %v463
    %v640 = vpack.c.b16 %v472, %v464
    %v641 = vpack.c.b16 %v473, %v465
    %v642 = vpack.c.b16 %v474, %v466
    %v643 = vpack.c.b16 %v475, %v467
    %v644 = vpack.c.b16 %v476, %v468
    %v645 = vpack.c.b16 %v477, %v469
    %v646 = vpack.c.b16 %v486, %v478
    %v647 = vpack.c.b16 %v487, %v479
    %v648 = vpack.c.b16 %v488, %v480
    %v649 = vpack.c.b16 %v489, %v481
    %v650 = vpack.c.b16 %v490, %v482
    %v651 = vpack.c.b16 %v491, %v483
    %v652 = vpack.c.b16 %v492, %v484
    %v653 = vpack.c.b16 %v493, %v485
    %v654 = vpack.c.b16 %v502, %v494
    %v655 = vpack.c.b16 %v503, %v495
    %v656 = vpack.c.b16 %v504, %v496
    %v657 = vpack.c.b16 %v505, %v497
    %v658 = vpack.c.b16 %v506, %v498
    %v659 = vpack.c.b16 %v507, %v499
    %v660 = vpack.c.b16 %v508, %v500
    %v661 = vpack.c.b16 %v509, %v501
    %v662 = vpack.c.b16 %v518, %v510
    %v663 = vpack.c.b16 %v519, %v511
    %v664 = vpack.c.b16 %v520, %v512
    %v665 = vpack.c.b16 %v521, %v513
    %v666 = vpack.c.b16 %v522, %v514
    %v667 = vpack.c.b16 %v523, %v515
    %v668 = vpack.c.b16 %v524, %v516
    %v669 = vpack.c.b16 %v525, %v517
    %v670 = vpack.c.b16 %v534, %v526
    %v671 = vpack.c.b16 %v535, %v527
    %v672 = vpack.c.b16 %v536, %v528
    %v673 = vpack.c.b16 %v537, %v529
    %v674 = vpack.c.b16 %v538, %v530
    %v675 = vpack.c.b16 %v539, %v531
    %v676 = vpack.c.b16 %v540, %v532
    %v677 = vpack.c.b16 %v541, %v533
    %v678 = vpack.c.b16 %v550, %v542
    %v679 = vpack.c.b16 %v551, %v543
    %v680 = vpack.c.b16 %v552, %v544
    %v681 = vpack.c.b16 %v553, %v545
    %v682 = vpack.c.b16 %v554, %v546
    %v683 = vpack.c.b16 %v555, %v547
    %v684 = vpack.c.b16 %v556, %v548
    %v685 = vpack.c.b16 %v557, %v549
    %814 = vmatpush.bf16.msra.mxu0 %v614
    %815 = vmatpush.bf16.msra.mxu0 %v606
    %816 = vmatpush.bf16.msra.mxu0 %v598
    %817 = vmatpush.bf16.msra.mxu0 %v590
    %818 = vmatpush.bf16.msra.mxu0 %v582
    %819 = vmatpush.bf16.msra.mxu0 %v574
    %820 = vmatpush.bf16.msra.mxu0 %v566
    %821 = vmatpush.bf16.msra.mxu0 %v558
    %822 = vmatmul.bf16.gmra.mxu0 %v170
    %v823 = vpop.f32.mrf.mxu0
    %v824 = vadd.f32 %v152, %v823
    %v825 = vpop.f32.mrf.mxu0
    %826 = vdwg.mxu0
    %827 = vmatpush.bf16.msra.mxu0 %v678
    %828 = vmatpush.bf16.msra.mxu0 %v670
    %829 = vmatpush.bf16.msra.mxu0 %v662
    %830 = vmatpush.bf16.msra.mxu0 %v654
    %831 = vmatpush.bf16.msra.mxu0 %v646
    %832 = vmatpush.bf16.msra.mxu0 %v638
    %833 = vmatpush.bf16.msra.mxu0 %v630
    %834 = vmatpush.bf16.msra.mxu0 %v622
    %835 = vmatmul.bf16.gmra.mxu0 %v171
    %v836 = vpop.f32.mrf.mxu0
    %v837 = vadd.f32 %v824, %v836
    %v838 = vpop.f32.mrf.mxu0
    %839 = vdwg.mxu0
    %840 = vmatpush.bf16.msra.mxu0 %v615
    %841 = vmatpush.bf16.msra.mxu0 %v607
    %842 = vmatpush.bf16.msra.mxu0 %v599
    %843 = vmatpush.bf16.msra.mxu0 %v591
    %844 = vmatpush.bf16.msra.mxu0 %v583
    %845 = vmatpush.bf16.msra.mxu0 %v575
    %846 = vmatpush.bf16.msra.mxu0 %v567
    %847 = vmatpush.bf16.msra.mxu0 %v559
    %848 = vmatmul.bf16.gmra.mxu0 %v170
    %v849 = vpop.f32.mrf.mxu0
    %v850 = vadd.f32 %v153, %v849
    %v851 = vpop.f32.mrf.mxu0
    %852 = vdwg.mxu0
    %853 = vmatpush.bf16.msra.mxu0 %v679
    %854 = vmatpush.bf16.msra.mxu0 %v671
    %855 = vmatpush.bf16.msra.mxu0 %v663
    %856 = vmatpush.bf16.msra.mxu0 %v655
    %857 = vmatpush.bf16.msra.mxu0 %v647
    %858 = vmatpush.bf16.msra.mxu0 %v639
    %859 = vmatpush.bf16.msra.mxu0 %v631
    %860 = vmatpush.bf16.msra.mxu0 %v623
    %861 = vmatmul.bf16.gmra.mxu0 %v171
    %v862 = vpop.f32.mrf.mxu0
    %v863 = vadd.f32 %v850, %v862
    %v864 = vpop.f32.mrf.mxu0
    %865 = vdwg.mxu0
    %866 = vmatpush.bf16.msra.mxu0 %v616
    %867 = vmatpush.bf16.msra.mxu0 %v608
    %868 = vmatpush.bf16.msra.mxu0 %v600
    %869 = vmatpush.bf16.msra.mxu0 %v592
    %870 = vmatpush.bf16.msra.mxu0 %v584
    %871 = vmatpush.bf16.msra.mxu0 %v576
    %872 = vmatpush.bf16.msra.mxu0 %v568
    %873 = vmatpush.bf16.msra.mxu0 %v560
    %874 = vmatmul.bf16.gmra.mxu0 %v170
    %v875 = vpop.f32.mrf.mxu0
    %v876 = vadd.f32 %v154, %v875
    %v877 = vpop.f32.mrf.mxu0
    %878 = vdwg.mxu0
    %879 = vmatpush.bf16.msra.mxu0 %v680
    %880 = vmatpush.bf16.msra.mxu0 %v672
    %881 = vmatpush.bf16.msra.mxu0 %v664
    %882 = vmatpush.bf16.msra.mxu0 %v656
    %883 = vmatpush.bf16.msra.mxu0 %v648
    %884 = vmatpush.bf16.msra.mxu0 %v640
    %885 = vmatpush.bf16.msra.mxu0 %v632
    %886 = vmatpush.bf16.msra.mxu0 %v624
    %887 = vmatmul.bf16.gmra.mxu0 %v171
    %v888 = vpop.f32.mrf.mxu0
    %v889 = vadd.f32 %v876, %v888
    %v890 = vpop.f32.mrf.mxu0
    %891 = vdwg.mxu0
    %892 = vmatpush.bf16.msra.mxu0 %v617
    %893 = vmatpush.bf16.msra.mxu0 %v609
    %894 = vmatpush.bf16.msra.mxu0 %v601
    %895 = vmatpush.bf16.msra.mxu0 %v593
    %896 = vmatpush.bf16.msra.mxu0 %v585
    %897 = vmatpush.bf16.msra.mxu0 %v577
    %898 = vmatpush.bf16.msra.mxu0 %v569
    %899 = vmatpush.bf16.msra.mxu0 %v561
    %900 = vmatmul.bf16.gmra.mxu0 %v170
    %v901 = vpop.f32.mrf.mxu0
    %v902 = vadd.f32 %v155, %v901
    %v903 = vpop.f32.mrf.mxu0
    %904 = vdwg.mxu0
    %905 = vmatpush.bf16.msra.mxu0 %v681
    %906 = vmatpush.bf16.msra.mxu0 %v673
    %907 = vmatpush.bf16.msra.mxu0 %v665
    %908 = vmatpush.bf16.msra.mxu0 %v657
    %909 = vmatpush.bf16.msra.mxu0 %v649
    %910 = vmatpush.bf16.msra.mxu0 %v641
    %911 = vmatpush.bf16.msra.mxu0 %v633
    %912 = vmatpush.bf16.msra.mxu0 %v625
    %913 = vmatmul.bf16.gmra.mxu0 %v171
    %v914 = vpop.f32.mrf.mxu0
    %v915 = vadd.f32 %v902, %v914
    %v916 = vpop.f32.mrf.mxu0
    %917 = vdwg.mxu0
    %918 = vmatpush.bf16.msra.mxu0 %v618
    %919 = vmatpush.bf16.msra.mxu0 %v610
    %920 = vmatpush.bf16.msra.mxu0 %v602
    %921 = vmatpush.bf16.msra.mxu0 %v594
    %922 = vmatpush.bf16.msra.mxu0 %v586
    %923 = vmatpush.bf16.msra.mxu0 %v578
    %924 = vmatpush.bf16.msra.mxu0 %v570
    %925 = vmatpush.bf16.msra.mxu0 %v562
    %926 = vmatmul.bf16.gmra.mxu0 %v170
    %v927 = vpop.f32.mrf.mxu0
    %v928 = vadd.f32 %v156, %v927
    %v929 = vpop.f32.mrf.mxu0
    %930 = vdwg.mxu0
    %931 = vmatpush.bf16.msra.mxu0 %v682
    %932 = vmatpush.bf16.msra.mxu0 %v674
    %933 = vmatpush.bf16.msra.mxu0 %v666
    %934 = vmatpush.bf16.msra.mxu0 %v658
    %935 = vmatpush.bf16.msra.mxu0 %v650
    %936 = vmatpush.bf16.msra.mxu0 %v642
    %937 = vmatpush.bf16.msra.mxu0 %v634
    %938 = vmatpush.bf16.msra.mxu0 %v626
    %939 = vmatmul.bf16.gmra.mxu0 %v171
    %v940 = vpop.f32.mrf.mxu0
    %v941 = vadd.f32 %v928, %v940
    %v942 = vpop.f32.mrf.mxu0
    %943 = vdwg.mxu0
    %944 = vmatpush.bf16.msra.mxu0 %v619
    %945 = vmatpush.bf16.msra.mxu0 %v611
    %946 = vmatpush.bf16.msra.mxu0 %v603
    %947 = vmatpush.bf16.msra.mxu0 %v595
    %948 = vmatpush.bf16.msra.mxu0 %v587
    %949 = vmatpush.bf16.msra.mxu0 %v579
    %950 = vmatpush.bf16.msra.mxu0 %v571
    %951 = vmatpush.bf16.msra.mxu0 %v563
    %952 = vmatmul.bf16.gmra.mxu0 %v170
    %v953 = vpop.f32.mrf.mxu0
    %v954 = vadd.f32 %v157, %v953
    %v955 = vpop.f32.mrf.mxu0
    %956 = vdwg.mxu0
    %957 = vmatpush.bf16.msra.mxu0 %v683
    %958 = vmatpush.bf16.msra.mxu0 %v675
    %959 = vmatpush.bf16.msra.mxu0 %v667
    %960 = vmatpush.bf16.msra.mxu0 %v659
    %961 = vmatpush.bf16.msra.mxu0 %v651
    %962 = vmatpush.bf16.msra.mxu0 %v643
    %963 = vmatpush.bf16.msra.mxu0 %v635
    %964 = vmatpush.bf16.msra.mxu0 %v627
    %965 = vmatmul.bf16.gmra.mxu0 %v171
    %v966 = vpop.f32.mrf.mxu0
    %v967 = vadd.f32 %v954, %v966
    %v968 = vpop.f32.mrf.mxu0
    %969 = vdwg.mxu0
    %970 = vmatpush.bf16.msra.mxu0 %v620
    %971 = vmatpush.bf16.msra.mxu0 %v612
    %972 = vmatpush.bf16.msra.mxu0 %v604
    %973 = vmatpush.bf16.msra.mxu0 %v596
    %974 = vmatpush.bf16.msra.mxu0 %v588
    %975 = vmatpush.bf16.msra.mxu0 %v580
    %976 = vmatpush.bf16.msra.mxu0 %v572
    %977 = vmatpush.bf16.msra.mxu0 %v564
    %978 = vmatmul.bf16.gmra.mxu0 %v170
    %v979 = vpop.f32.mrf.mxu0
    %v980 = vadd.f32 %v158, %v979
    %v981 = vpop.f32.mrf.mxu0
    %982 = vdwg.mxu0
    %983 = vmatpush.bf16.msra.mxu0 %v684
    %984 = vmatpush.bf16.msra.mxu0 %v676
    %985 = vmatpush.bf16.msra.mxu0 %v668
    %986 = vmatpush.bf16.msra.mxu0 %v660
    %987 = vmatpush.bf16.msra.mxu0 %v652
    %988 = vmatpush.bf16.msra.mxu0 %v644
    %989 = vmatpush.bf16.msra.mxu0 %v636
    %990 = vmatpush.bf16.msra.mxu0 %v628
    %991 = vmatmul.bf16.gmra.mxu0 %v171
    %v992 = vpop.f32.mrf.mxu0
    %v993 = vadd.f32 %v980, %v992
    %v994 = vpop.f32.mrf.mxu0
    %995 = vdwg.mxu0
    %996 = vmatpush.bf16.msra.mxu0 %v621
    %997 = vmatpush.bf16.msra.mxu0 %v613
    %998 = vmatpush.bf16.msra.mxu0 %v605
    %999 = vmatpush.bf16.msra.mxu0 %v597
    %1000 = vmatpush.bf16.msra.mxu0 %v589
    %1001 = vmatpush.bf16.msra.mxu0 %v581
    %1002 = vmatpush.bf16.msra.mxu0 %v573
    %1003 = vmatpush.bf16.msra.mxu0 %v565
    %1004 = vmatmul.bf16.gmra.mxu0 %v170
    %v1005 = vpop.f32.mrf.mxu0
    %v1006 = vadd.f32 %v159, %v1005
    %v1007 = vpop.f32.mrf.mxu0
    %1008 = vdwg.mxu0
    %1009 = vmatpush.bf16.msra.mxu0 %v685
    %1010 = vmatpush.bf16.msra.mxu0 %v677
    %1011 = vmatpush.bf16.msra.mxu0 %v669
    %1012 = vmatpush.bf16.msra.mxu0 %v661
    %1013 = vmatpush.bf16.msra.mxu0 %v653
    %1014 = vmatpush.bf16.msra.mxu0 %v645
    %1015 = vmatpush.bf16.msra.mxu0 %v637
    %1016 = vmatpush.bf16.msra.mxu0 %v629
    %1017 = vmatmul.bf16.gmra.mxu0 %v171
    %v1018 = vpop.f32.mrf.mxu0
    %v1019 = vadd.f32 %v1006, %v1018
    %v1020 = vpop.f32.mrf.mxu0
    %1021 = vdwg.mxu0
    %v1022 = vmax.f32 %v837, 0.0
    %v1023 = vmax.f32 %v863, 0.0
    %v1024 = vmax.f32 %v889, 0.0
    %v1025 = vmax.f32 %v915, 0.0
    %v1026 = vmax.f32 %v941, 0.0
    %v1027 = vmax.f32 %v967, 0.0
    %v1028 = vmax.f32 %v993, 0.0
    %v1029 = vmax.f32 %v1019, 0.0
    %v1030 = vpack.c.bf16 %v1022, %v1022
    %v1031 = vpack.c.bf16 %v1023, %v1023
    %v1032 = vpack.c.bf16 %v1024, %v1024
    %v1033 = vpack.c.bf16 %v1025, %v1025
    %v1034 = vpack.c.bf16 %v1026, %v1026
    %v1035 = vpack.c.bf16 %v1027, %v1027
    %v1036 = vpack.c.bf16 %v1028, %v1028
    %v1037 = vpack.c.bf16 %v1029, %v1029
    %v1038 = vld [vmem:[%s3] sm:$0xff]
    %v1039 = vld [vmem:[%s3 + $0x8] sm:$0xff]
    %v1040 = vld [vmem:[%s3 + $0x10] sm:$0xff]
    %v1041 = vld [vmem:[%s3 + $0x18] sm:$0xff]
    %v1042 = vld [vmem:[%s3 + $0x20] sm:$0xff]
    %v1043 = vld [vmem:[%s3 + $0x28] sm:$0xff]
    %v1044 = vld [vmem:[%s3 + $0x30] sm:$0xff]
    %v1045 = vld [vmem:[%s3 + $0x38] sm:$0xff]
    %v1046 = vld [vmem:[%s3 + $0x40] sm:$0xff]
    %v1047 = vld [vmem:[%s3 + $0x48] sm:$0xff]
    %v1048 = vld [vmem:[%s3 + $0x50] sm:$0xff]
    %v1049 = vld [vmem:[%s3 + $0x58] sm:$0xff]
    %v1050 = vld [vmem:[%s3 + $0x60] sm:$0xff]
    %v1051 = vld [vmem:[%s3 + $0x68] sm:$0xff]
    %v1052 = vld [vmem:[%s3 + $0x70] sm:$0xff]
    %v1053 = vld [vmem:[%s3 + $0x78] sm:$0xff]
    %v1054 = vld [vmem:[%s3 + $0x80] sm:$0xff]
    %v1055 = vld [vmem:[%s3 + $0x88] sm:$0xff]
    %v1056 = vld [vmem:[%s3 + $0x90] sm:$0xff]
    %v1057 = vld [vmem:[%s3 + $0x98] sm:$0xff]
    %v1058 = vld [vmem:[%s3 + $0xa0] sm:$0xff]
    %v1059 = vld [vmem:[%s3 + $0xa8] sm:$0xff]
    %v1060 = vld [vmem:[%s3 + $0xb0] sm:$0xff]
    %v1061 = vld [vmem:[%s3 + $0xb8] sm:$0xff]
    %v1062 = vld [vmem:[%s3 + $0xc0] sm:$0xff]
    %v1063 = vld [vmem:[%s3 + $0xc8] sm:$0xff]
    %v1064 = vld [vmem:[%s3 + $0xd0] sm:$0xff]
    %v1065 = vld [vmem:[%s3 + $0xd8] sm:$0xff]
    %v1066 = vld [vmem:[%s3 + $0xe0] sm:$0xff]
    %v1067 = vld [vmem:[%s3 + $0xe8] sm:$0xff]
    %v1068 = vld [vmem:[%s3 + $0xf0] sm:$0xff]
    %v1069 = vld [vmem:[%s3 + $0xf8] sm:$0xff]
    %v1070 = vld [vmem:[%s3 + $0x100] sm:$0xff]
    %v1071 = vld [vmem:[%s3 + $0x108] sm:$0xff]
    %v1072 = vld [vmem:[%s3 + $0x110] sm:$0xff]
    %v1073 = vld [vmem:[%s3 + $0x118] sm:$0xff]
    %v1074 = vld [vmem:[%s3 + $0x120] sm:$0xff]
    %v1075 = vld [vmem:[%s3 + $0x128] sm:$0xff]
    %v1076 = vld [vmem:[%s3 + $0x130] sm:$0xff]
    %v1077 = vld [vmem:[%s3 + $0x138] sm:$0xff]
    %v1078 = vld [vmem:[%s3 + $0x140] sm:$0xff]
    %v1079 = vld [vmem:[%s3 + $0x148] sm:$0xff]
    %v1080 = vld [vmem:[%s3 + $0x150] sm:$0xff]
    %v1081 = vld [vmem:[%s3 + $0x158] sm:$0xff]
    %v1082 = vld [vmem:[%s3 + $0x160] sm:$0xff]
    %v1083 = vld [vmem:[%s3 + $0x168] sm:$0xff]
    %v1084 = vld [vmem:[%s3 + $0x170] sm:$0xff]
    %v1085 = vld [vmem:[%s3 + $0x178] sm:$0xff]
    %v1086 = vld [vmem:[%s3 + $0x180] sm:$0xff]
    %v1087 = vld [vmem:[%s3 + $0x188] sm:$0xff]
    %v1088 = vld [vmem:[%s3 + $0x190] sm:$0xff]
    %v1089 = vld [vmem:[%s3 + $0x198] sm:$0xff]
    %v1090 = vld [vmem:[%s3 + $0x1a0] sm:$0xff]
    %v1091 = vld [vmem:[%s3 + $0x1a8] sm:$0xff]
    %v1092 = vld [vmem:[%s3 + $0x1b0] sm:$0xff]
    %v1093 = vld [vmem:[%s3 + $0x1b8] sm:$0xff]
    %v1094 = vld [vmem:[%s3 + $0x1c0] sm:$0xff]
    %v1095 = vld [vmem:[%s3 + $0x1c8] sm:$0xff]
    %v1096 = vld [vmem:[%s3 + $0x1d0] sm:$0xff]
    %v1097 = vld [vmem:[%s3 + $0x1d8] sm:$0xff]
    %v1098 = vld [vmem:[%s3 + $0x1e0] sm:$0xff]
    %v1099 = vld [vmem:[%s3 + $0x1e8] sm:$0xff]
    %v1100 = vld [vmem:[%s3 + $0x1f0] sm:$0xff]
    %v1101 = vld [vmem:[%s3 + $0x1f8] sm:$0xff]
    %v1102 = vld [vmem:[%s3 + $0x200] sm:$0xff]
    %v1103 = vld [vmem:[%s3 + $0x208] sm:$0xff]
    %v1104 = vld [vmem:[%s3 + $0x210] sm:$0xff]
    %v1105 = vld [vmem:[%s3 + $0x218] sm:$0xff]
    %v1106 = vld [vmem:[%s3 + $0x220] sm:$0xff]
    %v1107 = vld [vmem:[%s3 + $0x228] sm:$0xff]
    %v1108 = vld [vmem:[%s3 + $0x230] sm:$0xff]
    %v1109 = vld [vmem:[%s3 + $0x238] sm:$0xff]
    %v1110 = vld [vmem:[%s3 + $0x240] sm:$0xff]
    %v1111 = vld [vmem:[%s3 + $0x248] sm:$0xff]
    %v1112 = vld [vmem:[%s3 + $0x250] sm:$0xff]
    %v1113 = vld [vmem:[%s3 + $0x258] sm:$0xff]
    %v1114 = vld [vmem:[%s3 + $0x260] sm:$0xff]
    %v1115 = vld [vmem:[%s3 + $0x268] sm:$0xff]
    %v1116 = vld [vmem:[%s3 + $0x270] sm:$0xff]
    %v1117 = vld [vmem:[%s3 + $0x278] sm:$0xff]
    %v1118 = vld [vmem:[%s3 + $0x280] sm:$0xff]
    %v1119 = vld [vmem:[%s3 + $0x288] sm:$0xff]
    %v1120 = vld [vmem:[%s3 + $0x290] sm:$0xff]
    %v1121 = vld [vmem:[%s3 + $0x298] sm:$0xff]
    %v1122 = vld [vmem:[%s3 + $0x2a0] sm:$0xff]
    %v1123 = vld [vmem:[%s3 + $0x2a8] sm:$0xff]
    %v1124 = vld [vmem:[%s3 + $0x2b0] sm:$0xff]
    %v1125 = vld [vmem:[%s3 + $0x2b8] sm:$0xff]
    %v1126 = vld [vmem:[%s3 + $0x2c0] sm:$0xff]
    %v1127 = vld [vmem:[%s3 + $0x2c8] sm:$0xff]
    %v1128 = vld [vmem:[%s3 + $0x2d0] sm:$0xff]
    %v1129 = vld [vmem:[%s3 + $0x2d8] sm:$0xff]
    %v1130 = vld [vmem:[%s3 + $0x2e0] sm:$0xff]
    %v1131 = vld [vmem:[%s3 + $0x2e8] sm:$0xff]
    %v1132 = vld [vmem:[%s3 + $0x2f0] sm:$0xff]
    %v1133 = vld [vmem:[%s3 + $0x2f8] sm:$0xff]
    %v1134 = vld [vmem:[%s3 + $0x300] sm:$0xff]
    %v1135 = vld [vmem:[%s3 + $0x308] sm:$0xff]
    %v1136 = vld [vmem:[%s3 + $0x310] sm:$0xff]
    %v1137 = vld [vmem:[%s3 + $0x318] sm:$0xff]
    %v1138 = vld [vmem:[%s3 + $0x320] sm:$0xff]
    %v1139 = vld [vmem:[%s3 + $0x328] sm:$0xff]
    %v1140 = vld [vmem:[%s3 + $0x330] sm:$0xff]
    %v1141 = vld [vmem:[%s3 + $0x338] sm:$0xff]
    %v1142 = vld [vmem:[%s3 + $0x340] sm:$0xff]
    %v1143 = vld [vmem:[%s3 + $0x348] sm:$0xff]
    %v1144 = vld [vmem:[%s3 + $0x350] sm:$0xff]
    %v1145 = vld [vmem:[%s3 + $0x358] sm:$0xff]
    %v1146 = vld [vmem:[%s3 + $0x360] sm:$0xff]
    %v1147 = vld [vmem:[%s3 + $0x368] sm:$0xff]
    %v1148 = vld [vmem:[%s3 + $0x370] sm:$0xff]
    %v1149 = vld [vmem:[%s3 + $0x378] sm:$0xff]
    %v1150 = vld [vmem:[%s3 + $0x380] sm:$0xff]
    %v1151 = vld [vmem:[%s3 + $0x388] sm:$0xff]
    %v1152 = vld [vmem:[%s3 + $0x390] sm:$0xff]
    %v1153 = vld [vmem:[%s3 + $0x398] sm:$0xff]
    %v1154 = vld [vmem:[%s3 + $0x3a0] sm:$0xff]
    %v1155 = vld [vmem:[%s3 + $0x3a8] sm:$0xff]
    %v1156 = vld [vmem:[%s3 + $0x3b0] sm:$0xff]
    %v1157 = vld [vmem:[%s3 + $0x3b8] sm:$0xff]
    %v1158 = vld [vmem:[%s3 + $0x3c0] sm:$0xff]
    %v1159 = vld [vmem:[%s3 + $0x3c8] sm:$0xff]
    %v1160 = vld [vmem:[%s3 + $0x3d0] sm:$0xff]
    %v1161 = vld [vmem:[%s3 + $0x3d8] sm:$0xff]
    %v1162 = vld [vmem:[%s3 + $0x3e0] sm:$0xff]
    %v1163 = vld [vmem:[%s3 + $0x3e8] sm:$0xff]
    %v1164 = vld [vmem:[%s3 + $0x3f0] sm:$0xff]
    %v1165 = vld [vmem:[%s3 + $0x3f8] sm:$0xff]
    %v1166 = vld [vmem:[%s4] sm:$0x3]
    %v1168 = vperm.slane %v1166, 0
    %v1169 = vperm.slane %v1166, 1
    %v1300 = vunpack.c.l.b16 %v1038
    %v1301 = vunpack.c.h.b16 %v1038
    %v1302 = vunpack.c.l.b16 %v1039
    %v1303 = vunpack.c.h.b16 %v1039
    %v1304 = vunpack.c.l.b16 %v1040
    %v1305 = vunpack.c.h.b16 %v1040
    %v1306 = vunpack.c.l.b16 %v1041
    %v1307 = vunpack.c.h.b16 %v1041
    %v1308 = vunpack.c.l.b16 %v1042
    %v1309 = vunpack.c.h.b16 %v1042
    %v1310 = vunpack.c.l.b16 %v1043
    %v1311 = vunpack.c.h.b16 %v1043
    %v1312 = vunpack.c.l.b16 %v1044
    %v1313 = vunpack.c.h.b16 %v1044
    %v1314 = vunpack.c.l.b16 %v1045
    %v1315 = vunpack.c.h.b16 %v1045
    %v1316 = vunpack.c.l.b16 %v1046
    %v1317 = vunpack.c.h.b16 %v1046
    %v1318 = vunpack.c.l.b16 %v1047
    %v1319 = vunpack.c.h.b16 %v1047
    %v1320 = vunpack.c.l.b16 %v1048
    %v1321 = vunpack.c.h.b16 %v1048
    %v1322 = vunpack.c.l.b16 %v1049
    %v1323 = vunpack.c.h.b16 %v1049
    %v1324 = vunpack.c.l.b16 %v1050
    %v1325 = vunpack.c.h.b16 %v1050
    %v1326 = vunpack.c.l.b16 %v1051
    %v1327 = vunpack.c.h.b16 %v1051
    %v1328 = vunpack.c.l.b16 %v1052
    %v1329 = vunpack.c.h.b16 %v1052
    %v1330 = vunpack.c.l.b16 %v1053
    %v1331 = vunpack.c.h.b16 %v1053
    %v1332 = vunpack.c.l.b16 %v1054
    %v1333 = vunpack.c.h.b16 %v1054
    %v1334 = vunpack.c.l.b16 %v1055
    %v1335 = vunpack.c.h.b16 %v1055
    %v1336 = vunpack.c.l.b16 %v1056
    %v1337 = vunpack.c.h.b16 %v1056
    %v1338 = vunpack.c.l.b16 %v1057
    %v1339 = vunpack.c.h.b16 %v1057
    %v1340 = vunpack.c.l.b16 %v1058
    %v1341 = vunpack.c.h.b16 %v1058
    %v1342 = vunpack.c.l.b16 %v1059
    %v1343 = vunpack.c.h.b16 %v1059
    %v1344 = vunpack.c.l.b16 %v1060
    %v1345 = vunpack.c.h.b16 %v1060
    %v1346 = vunpack.c.l.b16 %v1061
    %v1347 = vunpack.c.h.b16 %v1061
    %v1348 = vunpack.c.l.b16 %v1062
    %v1349 = vunpack.c.h.b16 %v1062
    %v1350 = vunpack.c.l.b16 %v1063
    %v1351 = vunpack.c.h.b16 %v1063
    %v1352 = vunpack.c.l.b16 %v1064
    %v1353 = vunpack.c.h.b16 %v1064
    %v1354 = vunpack.c.l.b16 %v1065
    %v1355 = vunpack.c.h.b16 %v1065
    %v1356 = vunpack.c.l.b16 %v1066
    %v1357 = vunpack.c.h.b16 %v1066
    %v1358 = vunpack.c.l.b16 %v1067
    %v1359 = vunpack.c.h.b16 %v1067
    %v1360 = vunpack.c.l.b16 %v1068
    %v1361 = vunpack.c.h.b16 %v1068
    %v1362 = vunpack.c.l.b16 %v1069
    %v1363 = vunpack.c.h.b16 %v1069
    %v1364 = vunpack.c.l.b16 %v1070
    %v1365 = vunpack.c.h.b16 %v1070
    %v1366 = vunpack.c.l.b16 %v1071
    %v1367 = vunpack.c.h.b16 %v1071
    %v1368 = vunpack.c.l.b16 %v1072
    %v1369 = vunpack.c.h.b16 %v1072
    %v1370 = vunpack.c.l.b16 %v1073
    %v1371 = vunpack.c.h.b16 %v1073
    %v1372 = vunpack.c.l.b16 %v1074
    %v1373 = vunpack.c.h.b16 %v1074
    %v1374 = vunpack.c.l.b16 %v1075
    %v1375 = vunpack.c.h.b16 %v1075
    %v1376 = vunpack.c.l.b16 %v1076
    %v1377 = vunpack.c.h.b16 %v1076
    %v1378 = vunpack.c.l.b16 %v1077
    %v1379 = vunpack.c.h.b16 %v1077
    %v1380 = vunpack.c.l.b16 %v1078
    %v1381 = vunpack.c.h.b16 %v1078
    %v1382 = vunpack.c.l.b16 %v1079
    %v1383 = vunpack.c.h.b16 %v1079
    %v1384 = vunpack.c.l.b16 %v1080
    %v1385 = vunpack.c.h.b16 %v1080
    %v1386 = vunpack.c.l.b16 %v1081
    %v1387 = vunpack.c.h.b16 %v1081
    %v1388 = vunpack.c.l.b16 %v1082
    %v1389 = vunpack.c.h.b16 %v1082
    %v1390 = vunpack.c.l.b16 %v1083
    %v1391 = vunpack.c.h.b16 %v1083
    %v1392 = vunpack.c.l.b16 %v1084
    %v1393 = vunpack.c.h.b16 %v1084
    %v1394 = vunpack.c.l.b16 %v1085
    %v1395 = vunpack.c.h.b16 %v1085
    %v1396 = vunpack.c.l.b16 %v1086
    %v1397 = vunpack.c.h.b16 %v1086
    %v1398 = vunpack.c.l.b16 %v1087
    %v1399 = vunpack.c.h.b16 %v1087
    %v1400 = vunpack.c.l.b16 %v1088
    %v1401 = vunpack.c.h.b16 %v1088
    %v1402 = vunpack.c.l.b16 %v1089
    %v1403 = vunpack.c.h.b16 %v1089
    %v1404 = vunpack.c.l.b16 %v1090
    %v1405 = vunpack.c.h.b16 %v1090
    %v1406 = vunpack.c.l.b16 %v1091
    %v1407 = vunpack.c.h.b16 %v1091
    %v1408 = vunpack.c.l.b16 %v1092
    %v1409 = vunpack.c.h.b16 %v1092
    %v1410 = vunpack.c.l.b16 %v1093
    %v1411 = vunpack.c.h.b16 %v1093
    %v1412 = vunpack.c.l.b16 %v1094
    %v1413 = vunpack.c.h.b16 %v1094
    %v1414 = vunpack.c.l.b16 %v1095
    %v1415 = vunpack.c.h.b16 %v1095
    %v1416 = vunpack.c.l.b16 %v1096
    %v1417 = vunpack.c.h.b16 %v1096
    %v1418 = vunpack.c.l.b16 %v1097
    %v1419 = vunpack.c.h.b16 %v1097
    %v1420 = vunpack.c.l.b16 %v1098
    %v1421 = vunpack.c.h.b16 %v1098
    %v1422 = vunpack.c.l.b16 %v1099
    %v1423 = vunpack.c.h.b16 %v1099
    %v1424 = vunpack.c.l.b16 %v1100
    %v1425 = vunpack.c.h.b16 %v1100
    %v1426 = vunpack.c.l.b16 %v1101
    %v1427 = vunpack.c.h.b16 %v1101
    %v1428 = vunpack.c.l.b16 %v1102
    %v1429 = vunpack.c.h.b16 %v1102
    %v1430 = vunpack.c.l.b16 %v1103
    %v1431 = vunpack.c.h.b16 %v1103
    %v1432 = vunpack.c.l.b16 %v1104
    %v1433 = vunpack.c.h.b16 %v1104
    %v1434 = vunpack.c.l.b16 %v1105
    %v1435 = vunpack.c.h.b16 %v1105
    %v1436 = vunpack.c.l.b16 %v1106
    %v1437 = vunpack.c.h.b16 %v1106
    %v1438 = vunpack.c.l.b16 %v1107
    %v1439 = vunpack.c.h.b16 %v1107
    %v1440 = vunpack.c.l.b16 %v1108
    %v1441 = vunpack.c.h.b16 %v1108
    %v1442 = vunpack.c.l.b16 %v1109
    %v1443 = vunpack.c.h.b16 %v1109
    %v1444 = vunpack.c.l.b16 %v1110
    %v1445 = vunpack.c.h.b16 %v1110
    %v1446 = vunpack.c.l.b16 %v1111
    %v1447 = vunpack.c.h.b16 %v1111
    %v1448 = vunpack.c.l.b16 %v1112
    %v1449 = vunpack.c.h.b16 %v1112
    %v1450 = vunpack.c.l.b16 %v1113
    %v1451 = vunpack.c.h.b16 %v1113
    %v1452 = vunpack.c.l.b16 %v1114
    %v1453 = vunpack.c.h.b16 %v1114
    %v1454 = vunpack.c.l.b16 %v1115
    %v1455 = vunpack.c.h.b16 %v1115
    %v1456 = vunpack.c.l.b16 %v1116
    %v1457 = vunpack.c.h.b16 %v1116
    %v1458 = vunpack.c.l.b16 %v1117
    %v1459 = vunpack.c.h.b16 %v1117
    %v1460 = vunpack.c.l.b16 %v1118
    %v1461 = vunpack.c.h.b16 %v1118
    %v1462 = vunpack.c.l.b16 %v1119
    %v1463 = vunpack.c.h.b16 %v1119
    %v1464 = vunpack.c.l.b16 %v1120
    %v1465 = vunpack.c.h.b16 %v1120
    %v1466 = vunpack.c.l.b16 %v1121
    %v1467 = vunpack.c.h.b16 %v1121
    %v1468 = vunpack.c.l.b16 %v1122
    %v1469 = vunpack.c.h.b16 %v1122
    %v1470 = vunpack.c.l.b16 %v1123
    %v1471 = vunpack.c.h.b16 %v1123
    %v1472 = vunpack.c.l.b16 %v1124
    %v1473 = vunpack.c.h.b16 %v1124
    %v1474 = vunpack.c.l.b16 %v1125
    %v1475 = vunpack.c.h.b16 %v1125
    %v1476 = vunpack.c.l.b16 %v1126
    %v1477 = vunpack.c.h.b16 %v1126
    %v1478 = vunpack.c.l.b16 %v1127
    %v1479 = vunpack.c.h.b16 %v1127
    %v1480 = vunpack.c.l.b16 %v1128
    %v1481 = vunpack.c.h.b16 %v1128
    %v1482 = vunpack.c.l.b16 %v1129
    %v1483 = vunpack.c.h.b16 %v1129
    %v1484 = vunpack.c.l.b16 %v1130
    %v1485 = vunpack.c.h.b16 %v1130
    %v1486 = vunpack.c.l.b16 %v1131
    %v1487 = vunpack.c.h.b16 %v1131
    %v1488 = vunpack.c.l.b16 %v1132
    %v1489 = vunpack.c.h.b16 %v1132
    %v1490 = vunpack.c.l.b16 %v1133
    %v1491 = vunpack.c.h.b16 %v1133
    %v1492 = vunpack.c.l.b16 %v1134
    %v1493 = vunpack.c.h.b16 %v1134
    %v1494 = vunpack.c.l.b16 %v1135
    %v1495 = vunpack.c.h.b16 %v1135
    %v1496 = vunpack.c.l.b16 %v1136
    %v1497 = vunpack.c.h.b16 %v1136
    %v1498 = vunpack.c.l.b16 %v1137
    %v1499 = vunpack.c.h.b16 %v1137
    %v1500 = vunpack.c.l.b16 %v1138
    %v1501 = vunpack.c.h.b16 %v1138
    %v1502 = vunpack.c.l.b16 %v1139
    %v1503 = vunpack.c.h.b16 %v1139
    %v1504 = vunpack.c.l.b16 %v1140
    %v1505 = vunpack.c.h.b16 %v1140
    %v1506 = vunpack.c.l.b16 %v1141
    %v1507 = vunpack.c.h.b16 %v1141
    %v1508 = vunpack.c.l.b16 %v1142
    %v1509 = vunpack.c.h.b16 %v1142
    %v1510 = vunpack.c.l.b16 %v1143
    %v1511 = vunpack.c.h.b16 %v1143
    %v1512 = vunpack.c.l.b16 %v1144
    %v1513 = vunpack.c.h.b16 %v1144
    %v1514 = vunpack.c.l.b16 %v1145
    %v1515 = vunpack.c.h.b16 %v1145
    %v1516 = vunpack.c.l.b16 %v1146
    %v1517 = vunpack.c.h.b16 %v1146
    %v1518 = vunpack.c.l.b16 %v1147
    %v1519 = vunpack.c.h.b16 %v1147
    %v1520 = vunpack.c.l.b16 %v1148
    %v1521 = vunpack.c.h.b16 %v1148
    %v1522 = vunpack.c.l.b16 %v1149
    %v1523 = vunpack.c.h.b16 %v1149
    %v1524 = vunpack.c.l.b16 %v1150
    %v1525 = vunpack.c.h.b16 %v1150
    %v1526 = vunpack.c.l.b16 %v1151
    %v1527 = vunpack.c.h.b16 %v1151
    %v1528 = vunpack.c.l.b16 %v1152
    %v1529 = vunpack.c.h.b16 %v1152
    %v1530 = vunpack.c.l.b16 %v1153
    %v1531 = vunpack.c.h.b16 %v1153
    %v1532 = vunpack.c.l.b16 %v1154
    %v1533 = vunpack.c.h.b16 %v1154
    %v1534 = vunpack.c.l.b16 %v1155
    %v1535 = vunpack.c.h.b16 %v1155
    %v1536 = vunpack.c.l.b16 %v1156
    %v1537 = vunpack.c.h.b16 %v1156
    %v1538 = vunpack.c.l.b16 %v1157
    %v1539 = vunpack.c.h.b16 %v1157
    %v1540 = vunpack.c.l.b16 %v1158
    %v1541 = vunpack.c.h.b16 %v1158
    %v1542 = vunpack.c.l.b16 %v1159
    %v1543 = vunpack.c.h.b16 %v1159
    %v1544 = vunpack.c.l.b16 %v1160
    %v1545 = vunpack.c.h.b16 %v1160
    %v1546 = vunpack.c.l.b16 %v1161
    %v1547 = vunpack.c.h.b16 %v1161
    %v1548 = vunpack.c.l.b16 %v1162
    %v1549 = vunpack.c.h.b16 %v1162
    %v1550 = vunpack.c.l.b16 %v1163
    %v1551 = vunpack.c.h.b16 %v1163
    %v1552 = vunpack.c.l.b16 %v1164
    %v1553 = vunpack.c.h.b16 %v1164
    %v1554 = vunpack.c.l.b16 %v1165
    %v1555 = vunpack.c.h.b16 %v1165
    %v1556 = vpack.c.b16 %v1302, %v1300
    %v1557 = vpack.c.b16 %v1303, %v1301
    %v1558 = vpack.c.b16 %v1306, %v1304
    %v1559 = vpack.c.b16 %v1307, %v1305
    %v1560 = vpack.c.b16 %v1310, %v1308
    %v1561 = vpack.c.b16 %v1311, %v1309
    %v1562 = vpack.c.b16 %v1314, %v1312
    %v1563 = vpack.c.b16 %v1315, %v1313
    %v1564 = vpack.c.b16 %v1318, %v1316
    %v1565 = vpack.c.b16 %v1319, %v1317
    %v1566 = vpack.c.b16 %v1322, %v1320
    %v1567 = vpack.c.b16 %v1323, %v1321
    %v1568 = vpack.c.b16 %v1326, %v1324
    %v1569 = vpack.c.b16 %v1327, %v1325
    %v1570 = vpack.c.b16 %v1330, %v1328
    %v1571 = vpack.c.b16 %v1331, %v1329
    %v1572 = vpack.c.b16 %v1334, %v1332
    %v1573 = vpack.c.b16 %v1335, %v1333
    %v1574 = vpack.c.b16 %v1338, %v1336
    %v1575 = vpack.c.b16 %v1339, %v1337
    %v1576 = vpack.c.b16 %v1342, %v1340
    %v1577 = vpack.c.b16 %v1343, %v1341
    %v1578 = vpack.c.b16 %v1346, %v1344
    %v1579 = vpack.c.b16 %v1347, %v1345
    %v1580 = vpack.c.b16 %v1350, %v1348
    %v1581 = vpack.c.b16 %v1351, %v1349
    %v1582 = vpack.c.b16 %v1354, %v1352
    %v1583 = vpack.c.b16 %v1355, %v1353
    %v1584 = vpack.c.b16 %v1358, %v1356
    %v1585 = vpack.c.b16 %v1359, %v1357
    %v1586 = vpack.c.b16 %v1362, %v1360
    %v1587 = vpack.c.b16 %v1363, %v1361
    %v1588 = vpack.c.b16 %v1366, %v1364
    %v1589 = vpack.c.b16 %v1367, %v1365
    %v1590 = vpack.c.b16 %v1370, %v1368
    %v1591 = vpack.c.b16 %v1371, %v1369
    %v1592 = vpack.c.b16 %v1374, %v1372
    %v1593 = vpack.c.b16 %v1375, %v1373
    %v1594 = vpack.c.b16 %v1378, %v1376
    %v1595 = vpack.c.b16 %v1379, %v1377
    %v1596 = vpack.c.b16 %v1382, %v1380
    %v1597 = vpack.c.b16 %v1383, %v1381
    %v1598 = vpack.c.b16 %v1386, %v1384
    %v1599 = vpack.c.b16 %v1387, %v1385
    %v1600 = vpack.c.b16 %v1390, %v1388
    %v1601 = vpack.c.b16 %v1391, %v1389
    %v1602 = vpack.c.b16 %v1394, %v1392
    %v1603 = vpack.c.b16 %v1395, %v1393
    %v1604 = vpack.c.b16 %v1398, %v1396
    %v1605 = vpack.c.b16 %v1399, %v1397
    %v1606 = vpack.c.b16 %v1402, %v1400
    %v1607 = vpack.c.b16 %v1403, %v1401
    %v1608 = vpack.c.b16 %v1406, %v1404
    %v1609 = vpack.c.b16 %v1407, %v1405
    %v1610 = vpack.c.b16 %v1410, %v1408
    %v1611 = vpack.c.b16 %v1411, %v1409
    %v1612 = vpack.c.b16 %v1414, %v1412
    %v1613 = vpack.c.b16 %v1415, %v1413
    %v1614 = vpack.c.b16 %v1418, %v1416
    %v1615 = vpack.c.b16 %v1419, %v1417
    %v1616 = vpack.c.b16 %v1422, %v1420
    %v1617 = vpack.c.b16 %v1423, %v1421
    %v1618 = vpack.c.b16 %v1426, %v1424
    %v1619 = vpack.c.b16 %v1427, %v1425
    %v1620 = vpack.c.b16 %v1430, %v1428
    %v1621 = vpack.c.b16 %v1431, %v1429
    %v1622 = vpack.c.b16 %v1434, %v1432
    %v1623 = vpack.c.b16 %v1435, %v1433
    %v1624 = vpack.c.b16 %v1438, %v1436
    %v1625 = vpack.c.b16 %v1439, %v1437
    %v1626 = vpack.c.b16 %v1442, %v1440
    %v1627 = vpack.c.b16 %v1443, %v1441
    %v1628 = vpack.c.b16 %v1446, %v1444
    %v1629 = vpack.c.b16 %v1447, %v1445
    %v1630 = vpack.c.b16 %v1450, %v1448
    %v1631 = vpack.c.b16 %v1451, %v1449
    %v1632 = vpack.c.b16 %v1454, %v1452
    %v1633 = vpack.c.b16 %v1455, %v1453
    %v1634 = vpack.c.b16 %v1458, %v1456
    %v1635 = vpack.c.b16 %v1459, %v1457
    %v1636 = vpack.c.b16 %v1462, %v1460
    %v1637 = vpack.c.b16 %v1463, %v1461
    %v1638 = vpack.c.b16 %v1466, %v1464
    %v1639 = vpack.c.b16 %v1467, %v1465
    %v1640 = vpack.c.b16 %v1470, %v1468
    %v1641 = vpack.c.b16 %v1471, %v1469
    %v1642 = vpack.c.b16 %v1474, %v1472
    %v1643 = vpack.c.b16 %v1475, %v1473
    %v1644 = vpack.c.b16 %v1478, %v1476
    %v1645 = vpack.c.b16 %v1479, %v1477
    %v1646 = vpack.c.b16 %v1482, %v1480
    %v1647 = vpack.c.b16 %v1483, %v1481
    %v1648 = vpack.c.b16 %v1486, %v1484
    %v1649 = vpack.c.b16 %v1487, %v1485
    %v1650 = vpack.c.b16 %v1490, %v1488
    %v1651 = vpack.c.b16 %v1491, %v1489
    %v1652 = vpack.c.b16 %v1494, %v1492
    %v1653 = vpack.c.b16 %v1495, %v1493
    %v1654 = vpack.c.b16 %v1498, %v1496
    %v1655 = vpack.c.b16 %v1499, %v1497
    %v1656 = vpack.c.b16 %v1502, %v1500
    %v1657 = vpack.c.b16 %v1503, %v1501
    %v1658 = vpack.c.b16 %v1506, %v1504
    %v1659 = vpack.c.b16 %v1507, %v1505
    %v1660 = vpack.c.b16 %v1510, %v1508
    %v1661 = vpack.c.b16 %v1511, %v1509
    %v1662 = vpack.c.b16 %v1514, %v1512
    %v1663 = vpack.c.b16 %v1515, %v1513
    %v1664 = vpack.c.b16 %v1518, %v1516
    %v1665 = vpack.c.b16 %v1519, %v1517
    %v1666 = vpack.c.b16 %v1522, %v1520
    %v1667 = vpack.c.b16 %v1523, %v1521
    %v1668 = vpack.c.b16 %v1526, %v1524
    %v1669 = vpack.c.b16 %v1527, %v1525
    %v1670 = vpack.c.b16 %v1530, %v1528
    %v1671 = vpack.c.b16 %v1531, %v1529
    %v1672 = vpack.c.b16 %v1534, %v1532
    %v1673 = vpack.c.b16 %v1535, %v1533
    %v1674 = vpack.c.b16 %v1538, %v1536
    %v1675 = vpack.c.b16 %v1539, %v1537
    %v1676 = vpack.c.b16 %v1542, %v1540
    %v1677 = vpack.c.b16 %v1543, %v1541
    %v1678 = vpack.c.b16 %v1546, %v1544
    %v1679 = vpack.c.b16 %v1547, %v1545
    %v1680 = vpack.c.b16 %v1550, %v1548
    %v1681 = vpack.c.b16 %v1551, %v1549
    %v1682 = vpack.c.b16 %v1554, %v1552
    %v1683 = vpack.c.b16 %v1555, %v1553
    %1812 = vmatpush.bf16.msra.mxu0 %v1570
    %1813 = vmatpush.bf16.msra.mxu0 %v1568
    %1814 = vmatpush.bf16.msra.mxu0 %v1566
    %1815 = vmatpush.bf16.msra.mxu0 %v1564
    %1816 = vmatpush.bf16.msra.mxu0 %v1562
    %1817 = vmatpush.bf16.msra.mxu0 %v1560
    %1818 = vmatpush.bf16.msra.mxu0 %v1558
    %1819 = vmatpush.bf16.msra.mxu0 %v1556
    %1820 = vmatmul.bf16.gmra.mxu0 %v1030
    %v1821 = vpop.f32.mrf.mxu0
    %v1822 = vadd.f32 %v1168, %v1821
    %v1823 = vpop.f32.mrf.mxu0
    %1824 = vdwg.mxu0
    %1825 = vmatpush.bf16.msra.mxu0 %v1586
    %1826 = vmatpush.bf16.msra.mxu0 %v1584
    %1827 = vmatpush.bf16.msra.mxu0 %v1582
    %1828 = vmatpush.bf16.msra.mxu0 %v1580
    %1829 = vmatpush.bf16.msra.mxu0 %v1578
    %1830 = vmatpush.bf16.msra.mxu0 %v1576
    %1831 = vmatpush.bf16.msra.mxu0 %v1574
    %1832 = vmatpush.bf16.msra.mxu0 %v1572
    %1833 = vmatmul.bf16.gmra.mxu0 %v1031
    %v1834 = vpop.f32.mrf.mxu0
    %v1835 = vadd.f32 %v1822, %v1834
    %v1836 = vpop.f32.mrf.mxu0
    %1837 = vdwg.mxu0
    %1838 = vmatpush.bf16.msra.mxu0 %v1602
    %1839 = vmatpush.bf16.msra.mxu0 %v1600
    %1840 = vmatpush.bf16.msra.mxu0 %v1598
    %1841 = vmatpush.bf16.msra.mxu0 %v1596
    %1842 = vmatpush.bf16.msra.mxu0 %v1594
    %1843 = vmatpush.bf16.msra.mxu0 %v1592
    %1844 = vmatpush.bf16.msra.mxu0 %v1590
    %1845 = vmatpush.bf16.msra.mxu0 %v1588
    %1846 = vmatmul.bf16.gmra.mxu0 %v1032
    %v1847 = vpop.f32.mrf.mxu0
    %v1848 = vadd.f32 %v1835, %v1847
    %v1849 = vpop.f32.mrf.mxu0
    %1850 = vdwg.mxu0
    %1851 = vmatpush.bf16.msra.mxu0 %v1618
    %1852 = vmatpush.bf16.msra.mxu0 %v1616
    %1853 = vmatpush.bf16.msra.mxu0 %v1614
    %1854 = vmatpush.bf16.msra.mxu0 %v1612
    %1855 = vmatpush.bf16.msra.mxu0 %v1610
    %1856 = vmatpush.bf16.msra.mxu0 %v1608
    %1857 = vmatpush.bf16.msra.mxu0 %v1606
    %1858 = vmatpush.bf16.msra.mxu0 %v1604
    %1859 = vmatmul.bf16.gmra.mxu0 %v1033
    %v1860 = vpop.f32.mrf.mxu0
    %v1861 = vadd.f32 %v1848, %v1860
    %v1862 = vpop.f32.mrf.mxu0
    %1863 = vdwg.mxu0
    %1864 = vmatpush.bf16.msra.mxu0 %v1634
    %1865 = vmatpush.bf16.msra.mxu0 %v1632
    %1866 = vmatpush.bf16.msra.mxu0 %v1630
    %1867 = vmatpush.bf16.msra.mxu0 %v1628
    %1868 = vmatpush.bf16.msra.mxu0 %v1626
    %1869 = vmatpush.bf16.msra.mxu0 %v1624
    %1870 = vmatpush.bf16.msra.mxu0 %v1622
    %1871 = vmatpush.bf16.msra.mxu0 %v1620
    %1872 = vmatmul.bf16.gmra.mxu0 %v1034
    %v1873 = vpop.f32.mrf.mxu0
    %v1874 = vadd.f32 %v1861, %v1873
    %v1875 = vpop.f32.mrf.mxu0
    %1876 = vdwg.mxu0
    %1877 = vmatpush.bf16.msra.mxu0 %v1650
    %1878 = vmatpush.bf16.msra.mxu0 %v1648
    %1879 = vmatpush.bf16.msra.mxu0 %v1646
    %1880 = vmatpush.bf16.msra.mxu0 %v1644
    %1881 = vmatpush.bf16.msra.mxu0 %v1642
    %1882 = vmatpush.bf16.msra.mxu0 %v1640
    %1883 = vmatpush.bf16.msra.mxu0 %v1638
    %1884 = vmatpush.bf16.msra.mxu0 %v1636
    %1885 = vmatmul.bf16.gmra.mxu0 %v1035
    %v1886 = vpop.f32.mrf.mxu0
    %v1887 = vadd.f32 %v1874, %v1886
    %v1888 = vpop.f32.mrf.mxu0
    %1889 = vdwg.mxu0
    %1890 = vmatpush.bf16.msra.mxu0 %v1666
    %1891 = vmatpush.bf16.msra.mxu0 %v1664
    %1892 = vmatpush.bf16.msra.mxu0 %v1662
    %1893 = vmatpush.bf16.msra.mxu0 %v1660
    %1894 = vmatpush.bf16.msra.mxu0 %v1658
    %1895 = vmatpush.bf16.msra.mxu0 %v1656
    %1896 = vmatpush.bf16.msra.mxu0 %v1654
    %1897 = vmatpush.bf16.msra.mxu0 %v1652
    %1898 = vmatmul.bf16.gmra.mxu0 %v1036
    %v1899 = vpop.f32.mrf.mxu0
    %v1900 = vadd.f32 %v1887, %v1899
    %v1901 = vpop.f32.mrf.mxu0
    %1902 = vdwg.mxu0
    %1903 = vmatpush.bf16.msra.mxu0 %v1682
    %1904 = vmatpush.bf16.msra.mxu0 %v1680
    %1905 = vmatpush.bf16.msra.mxu0 %v1678
    %1906 = vmatpush.bf16.msra.mxu0 %v1676
    %1907 = vmatpush.bf16.msra.mxu0 %v1674
    %1908 = vmatpush.bf16.msra.mxu0 %v1672
    %1909 = vmatpush.bf16.msra.mxu0 %v1670
    %1910 = vmatpush.bf16.msra.mxu0 %v1668
    %1911 = vmatmul.bf16.gmra.mxu0 %v1037
    %v1912 = vpop.f32.mrf.mxu0
    %v1913 = vadd.f32 %v1900, %v1912
    %v1914 = vpop.f32.mrf.mxu0
    %1915 = vdwg.mxu0
    %1916 = vmatpush.bf16.msra.mxu0 %v1571
    %1917 = vmatpush.bf16.msra.mxu0 %v1569
    %1918 = vmatpush.bf16.msra.mxu0 %v1567
    %1919 = vmatpush.bf16.msra.mxu0 %v1565
    %1920 = vmatpush.bf16.msra.mxu0 %v1563
    %1921 = vmatpush.bf16.msra.mxu0 %v1561
    %1922 = vmatpush.bf16.msra.mxu0 %v1559
    %1923 = vmatpush.bf16.msra.mxu0 %v1557
    %1924 = vmatmul.bf16.gmra.mxu0 %v1030
    %v1925 = vpop.f32.mrf.mxu0
    %v1926 = vadd.f32 %v1169, %v1925
    %v1927 = vpop.f32.mrf.mxu0
    %1928 = vdwg.mxu0
    %1929 = vmatpush.bf16.msra.mxu0 %v1587
    %1930 = vmatpush.bf16.msra.mxu0 %v1585
    %1931 = vmatpush.bf16.msra.mxu0 %v1583
    %1932 = vmatpush.bf16.msra.mxu0 %v1581
    %1933 = vmatpush.bf16.msra.mxu0 %v1579
    %1934 = vmatpush.bf16.msra.mxu0 %v1577
    %1935 = vmatpush.bf16.msra.mxu0 %v1575
    %1936 = vmatpush.bf16.msra.mxu0 %v1573
    %1937 = vmatmul.bf16.gmra.mxu0 %v1031
    %v1938 = vpop.f32.mrf.mxu0
    %v1939 = vadd.f32 %v1926, %v1938
    %v1940 = vpop.f32.mrf.mxu0
    %1941 = vdwg.mxu0
    %1942 = vmatpush.bf16.msra.mxu0 %v1603
    %1943 = vmatpush.bf16.msra.mxu0 %v1601
    %1944 = vmatpush.bf16.msra.mxu0 %v1599
    %1945 = vmatpush.bf16.msra.mxu0 %v1597
    %1946 = vmatpush.bf16.msra.mxu0 %v1595
    %1947 = vmatpush.bf16.msra.mxu0 %v1593
    %1948 = vmatpush.bf16.msra.mxu0 %v1591
    %1949 = vmatpush.bf16.msra.mxu0 %v1589
    %1950 = vmatmul.bf16.gmra.mxu0 %v1032
    %v1951 = vpop.f32.mrf.mxu0
    %v1952 = vadd.f32 %v1939, %v1951
    %v1953 = vpop.f32.mrf.mxu0
    %1954 = vdwg.mxu0
    %1955 = vmatpush.bf16.msra.mxu0 %v1619
    %1956 = vmatpush.bf16.msra.mxu0 %v1617
    %1957 = vmatpush.bf16.msra.mxu0 %v1615
    %1958 = vmatpush.bf16.msra.mxu0 %v1613
    %1959 = vmatpush.bf16.msra.mxu0 %v1611
    %1960 = vmatpush.bf16.msra.mxu0 %v1609
    %1961 = vmatpush.bf16.msra.mxu0 %v1607
    %1962 = vmatpush.bf16.msra.mxu0 %v1605
    %1963 = vmatmul.bf16.gmra.mxu0 %v1033
    %v1964 = vpop.f32.mrf.mxu0
    %v1965 = vadd.f32 %v1952, %v1964
    %v1966 = vpop.f32.mrf.mxu0
    %1967 = vdwg.mxu0
    %1968 = vmatpush.bf16.msra.mxu0 %v1635
    %1969 = vmatpush.bf16.msra.mxu0 %v1633
    %1970 = vmatpush.bf16.msra.mxu0 %v1631
    %1971 = vmatpush.bf16.msra.mxu0 %v1629
    %1972 = vmatpush.bf16.msra.mxu0 %v1627
    %1973 = vmatpush.bf16.msra.mxu0 %v1625
    %1974 = vmatpush.bf16.msra.mxu0 %v1623
    %1975 = vmatpush.bf16.msra.mxu0 %v1621
    %1976 = vmatmul.bf16.gmra.mxu0 %v1034
    %v1977 = vpop.f32.mrf.mxu0
    %v1978 = vadd.f32 %v1965, %v1977
    %v1979 = vpop.f32.mrf.mxu0
    %1980 = vdwg.mxu0
    %1981 = vmatpush.bf16.msra.mxu0 %v1651
    %1982 = vmatpush.bf16.msra.mxu0 %v1649
    %1983 = vmatpush.bf16.msra.mxu0 %v1647
    %1984 = vmatpush.bf16.msra.mxu0 %v1645
    %1985 = vmatpush.bf16.msra.mxu0 %v1643
    %1986 = vmatpush.bf16.msra.mxu0 %v1641
    %1987 = vmatpush.bf16.msra.mxu0 %v1639
    %1988 = vmatpush.bf16.msra.mxu0 %v1637
    %1989 = vmatmul.bf16.gmra.mxu0 %v1035
    %v1990 = vpop.f32.mrf.mxu0
    %v1991 = vadd.f32 %v1978, %v1990
    %v1992 = vpop.f32.mrf.mxu0
    %1993 = vdwg.mxu0
    %1994 = vmatpush.bf16.msra.mxu0 %v1667
    %1995 = vmatpush.bf16.msra.mxu0 %v1665
    %1996 = vmatpush.bf16.msra.mxu0 %v1663
    %1997 = vmatpush.bf16.msra.mxu0 %v1661
    %1998 = vmatpush.bf16.msra.mxu0 %v1659
    %1999 = vmatpush.bf16.msra.mxu0 %v1657
    %2000 = vmatpush.bf16.msra.mxu0 %v1655
    %2001 = vmatpush.bf16.msra.mxu0 %v1653
    %2002 = vmatmul.bf16.gmra.mxu0 %v1036
    %v2003 = vpop.f32.mrf.mxu0
    %v2004 = vadd.f32 %v1991, %v2003
    %v2005 = vpop.f32.mrf.mxu0
    %2006 = vdwg.mxu0
    %2007 = vmatpush.bf16.msra.mxu0 %v1683
    %2008 = vmatpush.bf16.msra.mxu0 %v1681
    %2009 = vmatpush.bf16.msra.mxu0 %v1679
    %2010 = vmatpush.bf16.msra.mxu0 %v1677
    %2011 = vmatpush.bf16.msra.mxu0 %v1675
    %2012 = vmatpush.bf16.msra.mxu0 %v1673
    %2013 = vmatpush.bf16.msra.mxu0 %v1671
    %2014 = vmatpush.bf16.msra.mxu0 %v1669
    %2015 = vmatmul.bf16.gmra.mxu0 %v1037
    %v2016 = vpop.f32.mrf.mxu0
    %v2017 = vadd.f32 %v2004, %v2016
    %v2018 = vpop.f32.mrf.mxu0
    %2019 = vdwg.mxu0
    %2022 = vrot.lane.b32.xlu0 %v1913, 77
    %v2023 = vpop.permute.xlu0 %2022
    %2024 = vrot.lane.b32.xlu0 %v2017, 77
    %v2025 = vpop.permute.xlu0 %2024
    %vm2026 = vcmask 629760
    %v2027 = vsel %vm2026, %v2023, %v2025
    %v2029 = vadd.f32 %v1913, %v2027
    %2030 = vrot.lane.b32.xlu0 %v2017, 26
    %v2031 = vpop.permute.xlu0 %2030
    %v2033 = vadd.f32 %v2029, %v2031
    %2034 = vrot.lane.b32.xlu0 %v2017, 103
    %v2035 = vpop.permute.xlu0 %2034
    %v2037 = vadd.f32 %v2033, %v2035
    %v2038 = vmul.f32 %v2037, 0.25
    %v2040 = vadd.f32 %v1913, %v2023
    %2042 = vrot.lane.b32.xlu0 %v2038, 77
    %v2043 = vpop.permute.xlu0 %2042
    %v2045 = vsub.f32 %v2040, %v2043
    %v2047 = vrot.slane %v2045, 1
    %vm2049 = vcmask 409600
    %2050 = vst.msk [vmem:[#allocation2] sm:$0x1] %vm2049, %v2045
    %2051 = vst.msk [vmem:[#allocation2 + $0x4] sm:$0x1] %vm2049, %v2047
    %2052 = vrot.lane.b32.xlu0 %v1913, 26
    %v2053 = vpop.permute.xlu0 %2052
    %vm2054 = vcmask 211968
    %v2055 = vsel %vm2054, %v2053, %v2031
    %v2057 = vadd.f32 %v1913, %v2055
    %v2058 = vsub.f32 %v2057, %v2043
    %v2060 = vrot.slane %v2058, 1
    %2062 = vst.msk [vmem:[#allocation2 + $0x1] sm:$0x1] %vm2049, %v2058
    %2063 = vst.msk [vmem:[#allocation2 + $0x5] sm:$0x1] %vm2049, %v2060
    %v2064 = vadd.f32 %v1913, %v2035
    %v2065 = vsub.f32 %v2064, %v2043
    %v2067 = vrot.slane %v2065, 1
    %2069 = vst.msk [vmem:[#allocation2 + $0x2] sm:$0x1] %vm2049, %v2065
    %2070 = vst.msk [vmem:[#allocation2 + $0x6] sm:$0x1] %vm2049, %v2067
    %2071 = vrot.lane.b32.xlu0 %v2017, 52
    %v2072 = vpop.permute.xlu0 %2071
    %v2074 = vadd.f32 %v1913, %v2072
    %v2075 = vsub.f32 %v2074, %v2043
    %v2077 = vrot.slane %v2075, 1
    %2079 = vst.msk [vmem:[#allocation2 + $0x3] sm:$0x1] %vm2049, %v2075
    %2080 = vst.msk [vmem:[#allocation2 + $0x7] sm:$0x1] %vm2049, %v2077
    // Predicated region
    $region22: #{dqn_forward.7} parent=1 // pred_check
      _
    $region23: #{dqn_forward.7} parent=1 // pred_check_branch
      %2082 = sbr.rel (0) target = $region25
    $region24: #{dqn_forward.7} parent=1 // pred_region
      %2084 = vsyncadd [#allocation3], 0
      %s2085 = sshll.u32 [#allocation2], 4
      %s2086 = int_to_ptr.vmem [resolvable:$true] %s2085
      %s2087 = sshll.u32 %s5, 4
      %s2088 = int_to_ptr.hbm [resolvable:$true] %s2087
      %2093 = dma.vmem_to_hbm [thread:$0]  %s2086, 128, %s2088, [#allocation3], 64, 64, 4
    $region25: #{dqn_forward.7} parent=1 // pred_fallthru
      _
    // Predicated region
    $region26: #{dqn_forward.7} parent=1 // pred_check
      _
    $region27: #{dqn_forward.7} parent=1 // pred_check_branch
      %2095 = sbr.rel (0) target = $region29
    $region28: #{dqn_forward.7} parent=1 // pred_region
      %2097 = dma.done [#allocation3], 128
    $region29: #{dqn_forward.7} parent=1 // pred_fallthru
      _
    %2098 = vsyncpa [#allocation3], 1

</llo_original>
